<compile_context>
chip_gen: v7x
topology: tpu7x:2x2x1
jax: 0.10.0
libtpu: 0.0.40
codegen_flags: <defaults>
</compile_context>

<pallas_src>
import jax
import jax.numpy as jnp
from jax.experimental import pallas as pl
from jax.experimental.pallas import tpu as pltpu


# ----------------------------- Pallas kernel --------------------------------

def _ffn_kernel(x_ref, w1_ref, b1_ref, w2_ref, b2_ref, o_ref):
    # x: (br, C) f32, w1: (C, d_ffn) bf16, b1: (1, d_ffn) f32,
    # w2: (d_ffn, C) bf16, b2: (1, C) f32, o: (br, C) x.dtype
    x = x_ref[...]
    xb = x.astype(jnp.bfloat16)                                  # MXU input only
    h = jnp.dot(xb, w1_ref[...], preferred_element_type=jnp.float32)
    h = jnp.maximum(h + b1_ref[...], 0.0)                        # f32 VPU elementwise
    y = jnp.dot(h.astype(jnp.bfloat16), w2_ref[...],
                preferred_element_type=jnp.float32)
    y = y + b2_ref[...]
    o_ref[...] = (x.astype(jnp.float32) + y).astype(o_ref.dtype)


def _round_up(n, m):
    return ((n + m - 1) // m) * m


def feed_forward(x, w1, b1, w2, b2, *, block_rows=512):
    """x: (..., C).  Returns x + relu(x @ w1 + b1) @ w2 + b2, same shape / dtype.

    Matmuls run with bf16 operands / f32 accumulation; bias, ReLU and residual in f32.
    Dropout layers of the reference module are identity (eval mode).
    """
    orig_shape = x.shape
    C = orig_shape[-1]
    d_ffn = w1.shape[1]

    x2 = x.reshape(-1, C)                       # fold all leading dims into rows
    n = x2.shape[0]

    # Row tile: MXU-aligned (multiple of 256) once n is large, single 8-aligned tile
    # otherwise.  block_rows default (512) is already a multiple of 256.
    if n <= 128:
        br = _round_up(max(n, 8), 8)
    else:
        br = min(_round_up(n, 256), block_rows)
    n_pad = _round_up(n, br)
    if n_pad != n:
        x2 = jnp.pad(x2, ((0, n_pad - n), (0, 0)))
    grid_n = n_pad // br

    # Only split rows across TensorCores when each tile is big enough to amortize a
    # per-TC copy of the resident weights (v7x); otherwise keep it "arbitrary".
    semantics = ("parallel",) if (grid_n >= 2 and br >= 256) else ("arbitrary",)

    # bf16 weights feed the MXU natively and halve weight HBM bytes; biases stay f32.
    w1b = w1.astype(jnp.bfloat16)
    w2b = w2.astype(jnp.bfloat16)
    b1r = b1.reshape(1, d_ffn).astype(jnp.float32)
    b2r = b2.reshape(1, C).astype(jnp.float32)

    # Advisory cost estimate (two bf16 matmuls).
    flops = 4 * n_pad * C * d_ffn
    bytes_accessed = (2 * n_pad * C * x2.dtype.itemsize          # x in + out
                      + (C * d_ffn + d_ffn * C) * 2              # bf16 weights
                      + (d_ffn + C) * 4)                         # f32 biases

    # VMEM budget: x/out tiles double-buffered, f32 hidden temp, weights+biases
    # single-buffered (pl.Buffered(1) below).  Capped well under v7x's 64 MiB.
    vmem_bytes = (2 * 2 * br * C * max(x2.dtype.itemsize, 4)     # x + out tiles
                  + br * d_ffn * 4                               # f32 hidden temp
                  + (C * d_ffn + d_ffn * C) * 2                  # bf16 weights (x1)
                  + (d_ffn + C) * 4)                             # biases (x1)
    vmem_limit = int(min(max(2 * vmem_bytes, 32 << 20), 48 << 20))

    resident = pl.Buffered(1)   # constant index_map -> no need for double-buffering

    out = pl.pallas_call(
        _ffn_kernel,
        out_shape=jax.ShapeDtypeStruct((n_pad, C), x.dtype),
        grid=(grid_n,),
        in_specs=[
            pl.BlockSpec((br, C), lambda i: (i, 0)),                              # x (streamed)
            pl.BlockSpec((C, d_ffn), lambda i: (0, 0), pipeline_mode=resident),   # w1
            pl.BlockSpec((1, d_ffn), lambda i: (0, 0), pipeline_mode=resident),   # b1
            pl.BlockSpec((d_ffn, C), lambda i: (0, 0), pipeline_mode=resident),   # w2
            pl.BlockSpec((1, C), lambda i: (0, 0), pipeline_mode=resident),       # b2
        ],
        out_specs=pl.BlockSpec((br, C), lambda i: (i, 0)),
        compiler_params=pltpu.CompilerParams(
            dimension_semantics=semantics,
            vmem_limit_bytes=vmem_limit,
        ),
        cost_estimate=pl.CostEstimate(
            flops=flops, transcendentals=0, bytes_accessed=bytes_accessed),
    )(x2, w1b, b1r, w2b, b2r)

    if n_pad != n:
        out = out[:n]
    return out.reshape(orig_shape)


# ----------------------------- reference --------------------------------------

def _reference(x, w1, b1, w2, b2):
    """Pure-JAX reference with matching precision (bf16 MXU operands, f32 accum)."""
    w1b = w1.astype(jnp.bfloat16)
    w2b = w2.astype(jnp.bfloat16)
    h = jnp.dot(x.astype(jnp.bfloat16), w1b, preferred_element_type=jnp.float32) + b1
    h = jnp.maximum(h, 0.0)
    y = jnp.dot(h.astype(jnp.bfloat16), w2b, preferred_element_type=jnp.float32) + b2
    return x + y


# ----------------------------- main ------------------------------------------

if __name__ == "__main__":
    C, d_ffn = 256, 1024          # module defaults (lane-dense: multiples of 128)
    Lq, B = 8, 2                  # (seq, batch) as used in the decoder

    key = jax.random.PRNGKey(0)
    kx, k1, kb1, k2, kb2, kx2 = jax.random.split(key, 6)
    x = jax.random.normal(kx, (Lq, B, C), jnp.float32)
    w1 = (0.02 * jax.random.normal(k1, (C, d_ffn))).astype(jnp.float32)
    b1 = (0.02 * jax.random.normal(kb1, (d_ffn,))).astype(jnp.float32)
    w2 = (0.02 * jax.random.normal(k2, (d_ffn, C))).astype(jnp.float32)
    b2 = (0.02 * jax.random.normal(kb2, (C,))).astype(jnp.float32)

    fwd = jax.jit(feed_forward)

    # Small decoder-shaped case (16 rows, single tile, "arbitrary").
    out = jax.block_until_ready(fwd(x, w1, b1, w2, b2))
    ref = _reference(x, w1, b1, w2, b2)
    assert out.shape == x.shape, out.shape
    assert bool(jnp.all(jnp.isfinite(out)))
    assert bool(jnp.allclose(out, ref, atol=2e-3, rtol=2e-3)), \
        float(jnp.max(jnp.abs(out - ref)))

    # Larger case exercising the tiled ("parallel") path: 1024 rows, br=512, grid=(2,).
    x_big = jax.random.normal(kx2, (256, 4, C), jnp.float32)
    out_big = jax.block_until_ready(fwd(x_big, w1, b1, w2, b2))
    ref_big = _reference(x_big, w1, b1, w2, b2)
    assert out_big.shape == x_big.shape, out_big.shape
    assert bool(jnp.all(jnp.isfinite(out_big)))
    assert bool(jnp.allclose(out_big, ref_big, atol=2e-3, rtol=2e-3)), \
        float(jnp.max(jnp.abs(out_big - ref_big)))

    print("KERNEL_OK")
</pallas_src>

<mosaic_0001>
module attributes {stable_mosaic.version = 11 : i64} {
  func.func @_ffn_kernel(%arg0: i32, %arg1: memref<16x256xf32, #tpu.memory_space<vmem>>, %arg2: memref<256x1024xbf16, #tpu.memory_space<vmem>>, %arg3: memref<1x1024xf32, #tpu.memory_space<vmem>>, %arg4: memref<1024x256xbf16, #tpu.memory_space<vmem>>, %arg5: memref<1x256xf32, #tpu.memory_space<vmem>>, %arg6: memref<16x256xf32, #tpu.memory_space<vmem>>) attributes {dimension_semantics = [#tpu.dimension_semantics<arbitrary>], iteration_bounds = array<i64: 1>, scalar_prefetch = 0 : i64, scratch_operands = 0 : i64, tpu.core_type = #tpu.core_type<tc>, window_params = [{transform_indices = @transform_0, window_bounds = array<i64: 16, 256>}, {pipeline_mode = #tpu.pipeline_mode<synchronous>, transform_indices = @transform_1, window_bounds = array<i64: 256, 1024>}, {pipeline_mode = #tpu.pipeline_mode<synchronous>, transform_indices = @transform_2, window_bounds = array<i64: 1, 1024>}, {pipeline_mode = #tpu.pipeline_mode<synchronous>, transform_indices = @transform_3, window_bounds = array<i64: 1024, 256>}, {pipeline_mode = #tpu.pipeline_mode<synchronous>, transform_indices = @transform_4, window_bounds = array<i64: 1, 256>}, {transform_indices = @transform_5, window_bounds = array<i64: 16, 256>}]} {
    %c0 = arith.constant 0 : index
    %c0_0 = arith.constant 0 : index
    %0 = vector.load %arg1[%c0, %c0_0] : memref<16x256xf32, #tpu.memory_space<vmem>>, vector<16x256xf32>
    %1 = arith.truncf %0 : vector<16x256xf32> to vector<16x256xbf16>
    %c0_1 = arith.constant 0 : index
    %c0_2 = arith.constant 0 : index
    %2 = vector.load %arg2[%c0_1, %c0_2] : memref<256x1024xbf16, #tpu.memory_space<vmem>>, vector<256x1024xbf16>
    %cst = arith.constant dense<0.000000e+00> : vector<16x1024xf32>
    %3 = tpu.matmul %1, %2, %cst {dimension_numbers = #tpu.dot_dimension_numbers<[1], [0], [0], [1], [0, 0, 1, 1], [], []>} : vector<16x256xbf16>, vector<256x1024xbf16>, vector<16x1024xf32> -> vector<16x1024xf32>
    %c0_3 = arith.constant 0 : index
    %c0_4 = arith.constant 0 : index
    %4 = vector.load %arg3[%c0_3, %c0_4] : memref<1x1024xf32, #tpu.memory_space<vmem>>, vector<1x1024xf32>
    %5 = vector.broadcast %4 : vector<1x1024xf32> to vector<16x1024xf32>
    %6 = arith.addf %3, %5 : vector<16x1024xf32>
    %cst_5 = arith.constant 0.000000e+00 : f32
    %7 = vector.broadcast %cst_5 : f32 to vector<16x1024xf32>
    %8 = arith.maximumf %6, %7 : vector<16x1024xf32>
    %9 = arith.truncf %8 : vector<16x1024xf32> to vector<16x1024xbf16>
    %c0_6 = arith.constant 0 : index
    %c0_7 = arith.constant 0 : index
    %10 = vector.load %arg4[%c0_6, %c0_7] : memref<1024x256xbf16, #tpu.memory_space<vmem>>, vector<1024x256xbf16>
    %cst_8 = arith.constant dense<0.000000e+00> : vector<16x256xf32>
    %11 = tpu.matmul %9, %10, %cst_8 {dimension_numbers = #tpu.dot_dimension_numbers<[1], [0], [0], [1], [0, 0, 1, 1], [], []>} : vector<16x1024xbf16>, vector<1024x256xbf16>, vector<16x256xf32> -> vector<16x256xf32>
    %c0_9 = arith.constant 0 : index
    %c0_10 = arith.constant 0 : index
    %12 = vector.load %arg5[%c0_9, %c0_10] : memref<1x256xf32, #tpu.memory_space<vmem>>, vector<1x256xf32>
    %13 = vector.broadcast %12 : vector<1x256xf32> to vector<16x256xf32>
    %14 = arith.addf %11, %13 : vector<16x256xf32>
    %15 = arith.addf %0, %14 : vector<16x256xf32>
    %c0_11 = arith.constant 0 : index
    %c0_12 = arith.constant 0 : index
    %16 = vector.load %arg6[%c0_11, %c0_12] : memref<16x256xf32, #tpu.memory_space<vmem>>, vector<16x256xf32>
    tpu.vector_store %arg6[%c0_11, %c0_12], %15 {strides = array<i32>} : memref<16x256xf32, #tpu.memory_space<vmem>>, vector<16x256xf32>,
    return
  }
  func.func @transform_0(%arg0: i32) -> (i32, i32) {
    %c0_i32 = arith.constant 0 : i32
    %c0_i32_0 = arith.constant 0 : i32
    return %arg0, %c0_i32 : i32, i32
  }
  func.func @transform_1(%arg0: i32) -> (i32, i32) {
    %c0_i32 = arith.constant 0 : i32
    %c0_i32_0 = arith.constant 0 : i32
    %c0_i32_1 = arith.constant 0 : i32
    return %c0_i32, %c0_i32_0 : i32, i32
  }
  func.func @transform_2(%arg0: i32) -> (i32, i32) {
    %c0_i32 = arith.constant 0 : i32
    %c0_i32_0 = arith.constant 0 : i32
    %c0_i32_1 = arith.constant 0 : i32
    return %c0_i32, %c0_i32_0 : i32, i32
  }
  func.func @transform_3(%arg0: i32) -> (i32, i32) {
    %c0_i32 = arith.constant 0 : i32
    %c0_i32_0 = arith.constant 0 : i32
    %c0_i32_1 = arith.constant 0 : i32
    return %c0_i32, %c0_i32_0 : i32, i32
  }
  func.func @transform_4(%arg0: i32) -> (i32, i32) {
    %c0_i32 = arith.constant 0 : i32
    %c0_i32_0 = arith.constant 0 : i32
    %c0_i32_1 = arith.constant 0 : i32
    return %c0_i32, %c0_i32_0 : i32, i32
  }
  func.func @transform_5(%arg0: i32) -> (i32, i32) {
    %c0_i32 = arith.constant 0 : i32
    %c0_i32_0 = arith.constant 0 : i32
    return %arg0, %c0_i32 : i32, i32
  }
}

</mosaic_0001>

<llo_original>
// kernel: feed_forward.1
$region0: #{feed_forward.1}
  #allocation0 [shape = 'u32[]', space=smem, size = 0x4, offset = 0x4, fixed_abs, tag = 'smem constant byte address 0x4 - core index']
  #allocation1 [shape = 'u32[144,128]{1,0:T(1,128)}', space=vmem, size = 0x12000, scoped, tag = 'internal scratch']
  %s0 = inlined_call_operand.vmem [shape: f32[16,256], index: 0, kind: input, shape index: {}]
  %s1 = inlined_call_operand.vmem [shape: bf16[256,1024], index: 1, kind: input, shape index: {}]
  %s2 = inlined_call_operand.vmem [shape: f32[1,1024], index: 2, kind: input, shape index: {}]
  %s3 = inlined_call_operand.vmem [shape: bf16[1024,256], index: 3, kind: input, shape index: {}]
  %s4 = inlined_call_operand.vmem [shape: f32[1,256], index: 4, kind: input, shape index: {}]
  %s5 = inlined_call_operand.vmem [shape: f32[16,256], index: 5, kind: output, shape index: {}]
  %s6 = sld [smem:[#allocation0]]
  $region30: #{feed_forward.1} parent=0
    _
  %s8 = ssub.s32 1, %s6
  %s9 = scalar_select 0, %s8, %s6
  // Predicated region
  $region2: #{feed_forward.1} parent=0 // pred_check
    _
  $region3: #{feed_forward.1} parent=0 // pred_check_branch
    %11 = sbr.rel (0) target = $region5
  $region4: #{feed_forward.1} parent=0 // pred_region
    _
  $region5: #{feed_forward.1} parent=0 // pred_fallthru
    _
  // Predicated region
  $region6: #{feed_forward.1} parent=0 // pred_check
    _
  $region7: #{feed_forward.1} parent=0 // pred_check_branch
    %13 = sbr.rel (0) target = $region9
  $region8: #{feed_forward.1} parent=0 // pred_region
    _
  $region9: #{feed_forward.1} parent=0 // pred_fallthru
    _
  // Predicated region
  $region10: #{feed_forward.1} parent=0 // pred_check
    _
  $region11: #{feed_forward.1} parent=0 // pred_check_branch
    %15 = sbr.rel (0) target = $region13
  $region12: #{feed_forward.1} parent=0 // pred_region
    _
  $region13: #{feed_forward.1} parent=0 // pred_fallthru
    _
  // Predicated region
  $region14: #{feed_forward.1} parent=0 // pred_check
    _
  $region15: #{feed_forward.1} parent=0 // pred_check_branch
    %17 = sbr.rel (0) target = $region17
  $region16: #{feed_forward.1} parent=0 // pred_region
    _
  $region17: #{feed_forward.1} parent=0 // pred_fallthru
    _
  // Predicated region
  $region18: #{feed_forward.1} parent=0 // pred_check
    _
  $region19: #{feed_forward.1} parent=0 // pred_check_branch
    %19 = sbr.rel (0) target = $region21
  $region20: #{feed_forward.1} parent=0 // pred_region
    _
  $region21: #{feed_forward.1} parent=0 // pred_fallthru
    _
  %v20 = vld [vmem:[%s0] sm:$0xff]
  %v21 = vld [vmem:[%s0 + $0x8] sm:$0xff]
  %v22 = vld [vmem:[%s0 + $0x10] sm:$0xff]
  %v23 = vld [vmem:[%s0 + $0x18] sm:$0xff]
  %v24 = vpack.c.bf16 %v22, %v20
  %v25 = vpack.c.bf16 %v23, %v21
  %v26 = vld [vmem:[%s1] sm:$0xff]
  %v27 = vld [vmem:[%s1 + $0x8] sm:$0xff]
  %v28 = vld [vmem:[%s1 + $0x10] sm:$0xff]
  %v29 = vld [vmem:[%s1 + $0x18] sm:$0xff]
  %v30 = vld [vmem:[%s1 + $0x20] sm:$0xff]
  %v31 = vld [vmem:[%s1 + $0x28] sm:$0xff]
  %v32 = vld [vmem:[%s1 + $0x30] sm:$0xff]
  %v33 = vld [vmem:[%s1 + $0x38] sm:$0xff]
  %v34 = vld [vmem:[%s1 + $0x40] sm:$0xff]
  %v35 = vld [vmem:[%s1 + $0x48] sm:$0xff]
  %v36 = vld [vmem:[%s1 + $0x50] sm:$0xff]
  %v37 = vld [vmem:[%s1 + $0x58] sm:$0xff]
  %v38 = vld [vmem:[%s1 + $0x60] sm:$0xff]
  %v39 = vld [vmem:[%s1 + $0x68] sm:$0xff]
  %v40 = vld [vmem:[%s1 + $0x70] sm:$0xff]
  %v41 = vld [vmem:[%s1 + $0x78] sm:$0xff]
  %v42 = vld [vmem:[%s1 + $0x80] sm:$0xff]
  %v43 = vld [vmem:[%s1 + $0x88] sm:$0xff]
  %v44 = vld [vmem:[%s1 + $0x90] sm:$0xff]
  %v45 = vld [vmem:[%s1 + $0x98] sm:$0xff]
  %v46 = vld [vmem:[%s1 + $0xa0] sm:$0xff]
  %v47 = vld [vmem:[%s1 + $0xa8] sm:$0xff]
  %v48 = vld [vmem:[%s1 + $0xb0] sm:$0xff]
  %v49 = vld [vmem:[%s1 + $0xb8] sm:$0xff]
  %v50 = vld [vmem:[%s1 + $0xc0] sm:$0xff]
  %v51 = vld [vmem:[%s1 + $0xc8] sm:$0xff]
  %v52 = vld [vmem:[%s1 + $0xd0] sm:$0xff]
  %v53 = vld [vmem:[%s1 + $0xd8] sm:$0xff]
  %v54 = vld [vmem:[%s1 + $0xe0] sm:$0xff]
  %v55 = vld [vmem:[%s1 + $0xe8] sm:$0xff]
  %v56 = vld [vmem:[%s1 + $0xf0] sm:$0xff]
  %v57 = vld [vmem:[%s1 + $0xf8] sm:$0xff]
  %v58 = vld [vmem:[%s1 + $0x100] sm:$0xff]
  %v59 = vld [vmem:[%s1 + $0x108] sm:$0xff]
  %v60 = vld [vmem:[%s1 + $0x110] sm:$0xff]
  %v61 = vld [vmem:[%s1 + $0x118] sm:$0xff]
  %v62 = vld [vmem:[%s1 + $0x120] sm:$0xff]
  %v63 = vld [vmem:[%s1 + $0x128] sm:$0xff]
  %v64 = vld [vmem:[%s1 + $0x130] sm:$0xff]
  %v65 = vld [vmem:[%s1 + $0x138] sm:$0xff]
  %v66 = vld [vmem:[%s1 + $0x140] sm:$0xff]
  %v67 = vld [vmem:[%s1 + $0x148] sm:$0xff]
  %v68 = vld [vmem:[%s1 + $0x150] sm:$0xff]
  %v69 = vld [vmem:[%s1 + $0x158] sm:$0xff]
  %v70 = vld [vmem:[%s1 + $0x160] sm:$0xff]
  %v71 = vld [vmem:[%s1 + $0x168] sm:$0xff]
  %v72 = vld [vmem:[%s1 + $0x170] sm:$0xff]
  %v73 = vld [vmem:[%s1 + $0x178] sm:$0xff]
  %v74 = vld [vmem:[%s1 + $0x180] sm:$0xff]
  %v75 = vld [vmem:[%s1 + $0x188] sm:$0xff]
  %v76 = vld [vmem:[%s1 + $0x190] sm:$0xff]
  %v77 = vld [vmem:[%s1 + $0x198] sm:$0xff]
  %v78 = vld [vmem:[%s1 + $0x1a0] sm:$0xff]
  %v79 = vld [vmem:[%s1 + $0x1a8] sm:$0xff]
  %v80 = vld [vmem:[%s1 + $0x1b0] sm:$0xff]
  %v81 = vld [vmem:[%s1 + $0x1b8] sm:$0xff]
  %v82 = vld [vmem:[%s1 + $0x1c0] sm:$0xff]
  %v83 = vld [vmem:[%s1 + $0x1c8] sm:$0xff]
  %v84 = vld [vmem:[%s1 + $0x1d0] sm:$0xff]
  %v85 = vld [vmem:[%s1 + $0x1d8] sm:$0xff]
  %v86 = vld [vmem:[%s1 + $0x1e0] sm:$0xff]
  %v87 = vld [vmem:[%s1 + $0x1e8] sm:$0xff]
  %v88 = vld [vmem:[%s1 + $0x1f0] sm:$0xff]
  %v89 = vld [vmem:[%s1 + $0x1f8] sm:$0xff]
  %v90 = vld [vmem:[%s1 + $0x200] sm:$0xff]
  %v91 = vld [vmem:[%s1 + $0x208] sm:$0xff]
  %v92 = vld [vmem:[%s1 + $0x210] sm:$0xff]
  %v93 = vld [vmem:[%s1 + $0x218] sm:$0xff]
  %v94 = vld [vmem:[%s1 + $0x220] sm:$0xff]
  %v95 = vld [vmem:[%s1 + $0x228] sm:$0xff]
  %v96 = vld [vmem:[%s1 + $0x230] sm:$0xff]
  %v97 = vld [vmem:[%s1 + $0x238] sm:$0xff]
  %v98 = vld [vmem:[%s1 + $0x240] sm:$0xff]
  %v99 = vld [vmem:[%s1 + $0x248] sm:$0xff]
  %v100 = vld [vmem:[%s1 + $0x250] sm:$0xff]
  %v101 = vld [vmem:[%s1 + $0x258] sm:$0xff]
  %v102 = vld [vmem:[%s1 + $0x260] sm:$0xff]
  %v103 = vld [vmem:[%s1 + $0x268] sm:$0xff]
  %v104 = vld [vmem:[%s1 + $0x270] sm:$0xff]
  %v105 = vld [vmem:[%s1 + $0x278] sm:$0xff]
  %v106 = vld [vmem:[%s1 + $0x280] sm:$0xff]
  %v107 = vld [vmem:[%s1 + $0x288] sm:$0xff]
  %v108 = vld [vmem:[%s1 + $0x290] sm:$0xff]
  %v109 = vld [vmem:[%s1 + $0x298] sm:$0xff]
  %v110 = vld [vmem:[%s1 + $0x2a0] sm:$0xff]
  %v111 = vld [vmem:[%s1 + $0x2a8] sm:$0xff]
  %v112 = vld [vmem:[%s1 + $0x2b0] sm:$0xff]
  %v113 = vld [vmem:[%s1 + $0x2b8] sm:$0xff]
  %v114 = vld [vmem:[%s1 + $0x2c0] sm:$0xff]
  %v115 = vld [vmem:[%s1 + $0x2c8] sm:$0xff]
  %v116 = vld [vmem:[%s1 + $0x2d0] sm:$0xff]
  %v117 = vld [vmem:[%s1 + $0x2d8] sm:$0xff]
  %v118 = vld [vmem:[%s1 + $0x2e0] sm:$0xff]
  %v119 = vld [vmem:[%s1 + $0x2e8] sm:$0xff]
  %v120 = vld [vmem:[%s1 + $0x2f0] sm:$0xff]
  %v121 = vld [vmem:[%s1 + $0x2f8] sm:$0xff]
  %v122 = vld [vmem:[%s1 + $0x300] sm:$0xff]
  %v123 = vld [vmem:[%s1 + $0x308] sm:$0xff]
  %v124 = vld [vmem:[%s1 + $0x310] sm:$0xff]
  %v125 = vld [vmem:[%s1 + $0x318] sm:$0xff]
  %v126 = vld [vmem:[%s1 + $0x320] sm:$0xff]
  %v127 = vld [vmem:[%s1 + $0x328] sm:$0xff]
  %v128 = vld [vmem:[%s1 + $0x330] sm:$0xff]
  %v129 = vld [vmem:[%s1 + $0x338] sm:$0xff]
  %v130 = vld [vmem:[%s1 + $0x340] sm:$0xff]
  %v131 = vld [vmem:[%s1 + $0x348] sm:$0xff]
  %v132 = vld [vmem:[%s1 + $0x350] sm:$0xff]
  %v133 = vld [vmem:[%s1 + $0x358] sm:$0xff]
  %v134 = vld [vmem:[%s1 + $0x360] sm:$0xff]
  %v135 = vld [vmem:[%s1 + $0x368] sm:$0xff]
  %v136 = vld [vmem:[%s1 + $0x370] sm:$0xff]
  %v137 = vld [vmem:[%s1 + $0x378] sm:$0xff]
  %v138 = vld [vmem:[%s1 + $0x380] sm:$0xff]
  %v139 = vld [vmem:[%s1 + $0x388] sm:$0xff]
  %v140 = vld [vmem:[%s1 + $0x390] sm:$0xff]
  %v141 = vld [vmem:[%s1 + $0x398] sm:$0xff]
  %v142 = vld [vmem:[%s1 + $0x3a0] sm:$0xff]
  %v143 = vld [vmem:[%s1 + $0x3a8] sm:$0xff]
  %v144 = vld [vmem:[%s1 + $0x3b0] sm:$0xff]
  %v145 = vld [vmem:[%s1 + $0x3b8] sm:$0xff]
  %v146 = vld [vmem:[%s1 + $0x3c0] sm:$0xff]
  %v147 = vld [vmem:[%s1 + $0x3c8] sm:$0xff]
  %v148 = vld [vmem:[%s1 + $0x3d0] sm:$0xff]
  %v149 = vld [vmem:[%s1 + $0x3d8] sm:$0xff]
  %v150 = vld [vmem:[%s1 + $0x3e0] sm:$0xff]
  %v151 = vld [vmem:[%s1 + $0x3e8] sm:$0xff]
  %v152 = vld [vmem:[%s1 + $0x3f0] sm:$0xff]
  %v153 = vld [vmem:[%s1 + $0x3f8] sm:$0xff]
  %v154 = vld [vmem:[%s2] sm:$0xff]
  %v156 = vlaneseq
  %v157 = vshrl.u32 %v156, 7
  %v158 = vsub.s32 0, %v157
  %v159 = vrot.slane %v154, %v158
  %v160 = vlaneseq
  %v161 = vshrl.u32 %v160, 7
  %v162 = vsub.s32 1, %v161
  %v163 = vrot.slane %v154, %v162
  %v164 = vlaneseq
  %v165 = vshrl.u32 %v164, 7
  %v166 = vsub.s32 2, %v165
  %v167 = vrot.slane %v154, %v166
  %v168 = vlaneseq
  %v169 = vshrl.u32 %v168, 7
  %v170 = vsub.s32 3, %v169
  %v171 = vrot.slane %v154, %v170
  %v172 = vlaneseq
  %v173 = vshrl.u32 %v172, 7
  %v174 = vsub.s32 4, %v173
  %v175 = vrot.slane %v154, %v174
  %v176 = vlaneseq
  %v177 = vshrl.u32 %v176, 7
  %v178 = vsub.s32 5, %v177
  %v179 = vrot.slane %v154, %v178
  %v180 = vlaneseq
  %v181 = vshrl.u32 %v180, 7
  %v182 = vsub.s32 6, %v181
  %v183 = vrot.slane %v154, %v182
  %v184 = vlaneseq
  %v185 = vshrl.u32 %v184, 7
  %v186 = vsub.s32 7, %v185
  %v187 = vrot.slane %v154, %v186
  %v324 = vunpack.c.l.b16 %v26
  %v325 = vunpack.c.h.b16 %v26
  %v326 = vunpack.c.l.b16 %v27
  %v327 = vunpack.c.h.b16 %v27
  %v328 = vunpack.c.l.b16 %v28
  %v329 = vunpack.c.h.b16 %v28
  %v330 = vunpack.c.l.b16 %v29
  %v331 = vunpack.c.h.b16 %v29
  %v332 = vunpack.c.l.b16 %v30
  %v333 = vunpack.c.h.b16 %v30
  %v334 = vunpack.c.l.b16 %v31
  %v335 = vunpack.c.h.b16 %v31
  %v336 = vunpack.c.l.b16 %v32
  %v337 = vunpack.c.h.b16 %v32
  %v338 = vunpack.c.l.b16 %v33
  %v339 = vunpack.c.h.b16 %v33
  %v340 = vunpack.c.l.b16 %v34
  %v341 = vunpack.c.h.b16 %v34
  %v342 = vunpack.c.l.b16 %v35
  %v343 = vunpack.c.h.b16 %v35
  %v344 = vunpack.c.l.b16 %v36
  %v345 = vunpack.c.h.b16 %v36
  %v346 = vunpack.c.l.b16 %v37
  %v347 = vunpack.c.h.b16 %v37
  %v348 = vunpack.c.l.b16 %v38
  %v349 = vunpack.c.h.b16 %v38
  %v350 = vunpack.c.l.b16 %v39
  %v351 = vunpack.c.h.b16 %v39
  %v352 = vunpack.c.l.b16 %v40
  %v353 = vunpack.c.h.b16 %v40
  %v354 = vunpack.c.l.b16 %v41
  %v355 = vunpack.c.h.b16 %v41
  %v356 = vunpack.c.l.b16 %v42
  %v357 = vunpack.c.h.b16 %v42
  %v358 = vunpack.c.l.b16 %v43
  %v359 = vunpack.c.h.b16 %v43
  %v360 = vunpack.c.l.b16 %v44
  %v361 = vunpack.c.h.b16 %v44
  %v362 = vunpack.c.l.b16 %v45
  %v363 = vunpack.c.h.b16 %v45
  %v364 = vunpack.c.l.b16 %v46
  %v365 = vunpack.c.h.b16 %v46
  %v366 = vunpack.c.l.b16 %v47
  %v367 = vunpack.c.h.b16 %v47
  %v368 = vunpack.c.l.b16 %v48
  %v369 = vunpack.c.h.b16 %v48
  %v370 = vunpack.c.l.b16 %v49
  %v371 = vunpack.c.h.b16 %v49
  %v372 = vunpack.c.l.b16 %v50
  %v373 = vunpack.c.h.b16 %v50
  %v374 = vunpack.c.l.b16 %v51
  %v375 = vunpack.c.h.b16 %v51
  %v376 = vunpack.c.l.b16 %v52
  %v377 = vunpack.c.h.b16 %v52
  %v378 = vunpack.c.l.b16 %v53
  %v379 = vunpack.c.h.b16 %v53
  %v380 = vunpack.c.l.b16 %v54
  %v381 = vunpack.c.h.b16 %v54
  %v382 = vunpack.c.l.b16 %v55
  %v383 = vunpack.c.h.b16 %v55
  %v384 = vunpack.c.l.b16 %v56
  %v385 = vunpack.c.h.b16 %v56
  %v386 = vunpack.c.l.b16 %v57
  %v387 = vunpack.c.h.b16 %v57
  %v388 = vunpack.c.l.b16 %v58
  %v389 = vunpack.c.h.b16 %v58
  %v390 = vunpack.c.l.b16 %v59
  %v391 = vunpack.c.h.b16 %v59
  %v392 = vunpack.c.l.b16 %v60
  %v393 = vunpack.c.h.b16 %v60
  %v394 = vunpack.c.l.b16 %v61
  %v395 = vunpack.c.h.b16 %v61
  %v396 = vunpack.c.l.b16 %v62
  %v397 = vunpack.c.h.b16 %v62
  %v398 = vunpack.c.l.b16 %v63
  %v399 = vunpack.c.h.b16 %v63
  %v400 = vunpack.c.l.b16 %v64
  %v401 = vunpack.c.h.b16 %v64
  %v402 = vunpack.c.l.b16 %v65
  %v403 = vunpack.c.h.b16 %v65
  %v404 = vunpack.c.l.b16 %v66
  %v405 = vunpack.c.h.b16 %v66
  %v406 = vunpack.c.l.b16 %v67
  %v407 = vunpack.c.h.b16 %v67
  %v408 = vunpack.c.l.b16 %v68
  %v409 = vunpack.c.h.b16 %v68
  %v410 = vunpack.c.l.b16 %v69
  %v411 = vunpack.c.h.b16 %v69
  %v412 = vunpack.c.l.b16 %v70
  %v413 = vunpack.c.h.b16 %v70
  %v414 = vunpack.c.l.b16 %v71
  %v415 = vunpack.c.h.b16 %v71
  %v416 = vunpack.c.l.b16 %v72
  %v417 = vunpack.c.h.b16 %v72
  %v418 = vunpack.c.l.b16 %v73
  %v419 = vunpack.c.h.b16 %v73
  %v420 = vunpack.c.l.b16 %v74
  %v421 = vunpack.c.h.b16 %v74
  %v422 = vunpack.c.l.b16 %v75
  %v423 = vunpack.c.h.b16 %v75
  %v424 = vunpack.c.l.b16 %v76
  %v425 = vunpack.c.h.b16 %v76
  %v426 = vunpack.c.l.b16 %v77
  %v427 = vunpack.c.h.b16 %v77
  %v428 = vunpack.c.l.b16 %v78
  %v429 = vunpack.c.h.b16 %v78
  %v430 = vunpack.c.l.b16 %v79
  %v431 = vunpack.c.h.b16 %v79
  %v432 = vunpack.c.l.b16 %v80
  %v433 = vunpack.c.h.b16 %v80
  %v434 = vunpack.c.l.b16 %v81
  %v435 = vunpack.c.h.b16 %v81
  %v436 = vunpack.c.l.b16 %v82
  %v437 = vunpack.c.h.b16 %v82
  %v438 = vunpack.c.l.b16 %v83
  %v439 = vunpack.c.h.b16 %v83
  %v440 = vunpack.c.l.b16 %v84
  %v441 = vunpack.c.h.b16 %v84
  %v442 = vunpack.c.l.b16 %v85
  %v443 = vunpack.c.h.b16 %v85
  %v444 = vunpack.c.l.b16 %v86
  %v445 = vunpack.c.h.b16 %v86
  %v446 = vunpack.c.l.b16 %v87
  %v447 = vunpack.c.h.b16 %v87
  %v448 = vunpack.c.l.b16 %v88
  %v449 = vunpack.c.h.b16 %v88
  %v450 = vunpack.c.l.b16 %v89
  %v451 = vunpack.c.h.b16 %v89
  %v452 = vunpack.c.l.b16 %v90
  %v453 = vunpack.c.h.b16 %v90
  %v454 = vunpack.c.l.b16 %v91
  %v455 = vunpack.c.h.b16 %v91
  %v456 = vunpack.c.l.b16 %v92
  %v457 = vunpack.c.h.b16 %v92
  %v458 = vunpack.c.l.b16 %v93
  %v459 = vunpack.c.h.b16 %v93
  %v460 = vunpack.c.l.b16 %v94
  %v461 = vunpack.c.h.b16 %v94
  %v462 = vunpack.c.l.b16 %v95
  %v463 = vunpack.c.h.b16 %v95
  %v464 = vunpack.c.l.b16 %v96
  %v465 = vunpack.c.h.b16 %v96
  %v466 = vunpack.c.l.b16 %v97
  %v467 = vunpack.c.h.b16 %v97
  %v468 = vunpack.c.l.b16 %v98
  %v469 = vunpack.c.h.b16 %v98
  %v470 = vunpack.c.l.b16 %v99
  %v471 = vunpack.c.h.b16 %v99
  %v472 = vunpack.c.l.b16 %v100
  %v473 = vunpack.c.h.b16 %v100
  %v474 = vunpack.c.l.b16 %v101
  %v475 = vunpack.c.h.b16 %v101
  %v476 = vunpack.c.l.b16 %v102
  %v477 = vunpack.c.h.b16 %v102
  %v478 = vunpack.c.l.b16 %v103
  %v479 = vunpack.c.h.b16 %v103
  %v480 = vunpack.c.l.b16 %v104
  %v481 = vunpack.c.h.b16 %v104
  %v482 = vunpack.c.l.b16 %v105
  %v483 = vunpack.c.h.b16 %v105
  %v484 = vunpack.c.l.b16 %v106
  %v485 = vunpack.c.h.b16 %v106
  %v486 = vunpack.c.l.b16 %v107
  %v487 = vunpack.c.h.b16 %v107
  %v488 = vunpack.c.l.b16 %v108
  %v489 = vunpack.c.h.b16 %v108
  %v490 = vunpack.c.l.b16 %v109
  %v491 = vunpack.c.h.b16 %v109
  %v492 = vunpack.c.l.b16 %v110
  %v493 = vunpack.c.h.b16 %v110
  %v494 = vunpack.c.l.b16 %v111
  %v495 = vunpack.c.h.b16 %v111
  %v496 = vunpack.c.l.b16 %v112
  %v497 = vunpack.c.h.b16 %v112
  %v498 = vunpack.c.l.b16 %v113
  %v499 = vunpack.c.h.b16 %v113
  %v500 = vunpack.c.l.b16 %v114
  %v501 = vunpack.c.h.b16 %v114
  %v502 = vunpack.c.l.b16 %v115
  %v503 = vunpack.c.h.b16 %v115
  %v504 = vunpack.c.l.b16 %v116
  %v505 = vunpack.c.h.b16 %v116
  %v506 = vunpack.c.l.b16 %v117
  %v507 = vunpack.c.h.b16 %v117
  %v508 = vunpack.c.l.b16 %v118
  %v509 = vunpack.c.h.b16 %v118
  %v510 = vunpack.c.l.b16 %v119
  %v511 = vunpack.c.h.b16 %v119
  %v512 = vunpack.c.l.b16 %v120
  %v513 = vunpack.c.h.b16 %v120
  %v514 = vunpack.c.l.b16 %v121
  %v515 = vunpack.c.h.b16 %v121
  %v516 = vunpack.c.l.b16 %v122
  %v517 = vunpack.c.h.b16 %v122
  %v518 = vunpack.c.l.b16 %v123
  %v519 = vunpack.c.h.b16 %v123
  %v520 = vunpack.c.l.b16 %v124
  %v521 = vunpack.c.h.b16 %v124
  %v522 = vunpack.c.l.b16 %v125
  %v523 = vunpack.c.h.b16 %v125
  %v524 = vunpack.c.l.b16 %v126
  %v525 = vunpack.c.h.b16 %v126
  %v526 = vunpack.c.l.b16 %v127
  %v527 = vunpack.c.h.b16 %v127
  %v528 = vunpack.c.l.b16 %v128
  %v529 = vunpack.c.h.b16 %v128
  %v530 = vunpack.c.l.b16 %v129
  %v531 = vunpack.c.h.b16 %v129
  %v532 = vunpack.c.l.b16 %v130
  %v533 = vunpack.c.h.b16 %v130
  %v534 = vunpack.c.l.b16 %v131
  %v535 = vunpack.c.h.b16 %v131
  %v536 = vunpack.c.l.b16 %v132
  %v537 = vunpack.c.h.b16 %v132
  %v538 = vunpack.c.l.b16 %v133
  %v539 = vunpack.c.h.b16 %v133
  %v540 = vunpack.c.l.b16 %v134
  %v541 = vunpack.c.h.b16 %v134
  %v542 = vunpack.c.l.b16 %v135
  %v543 = vunpack.c.h.b16 %v135
  %v544 = vunpack.c.l.b16 %v136
  %v545 = vunpack.c.h.b16 %v136
  %v546 = vunpack.c.l.b16 %v137
  %v547 = vunpack.c.h.b16 %v137
  %v548 = vunpack.c.l.b16 %v138
  %v549 = vunpack.c.h.b16 %v138
  %v550 = vunpack.c.l.b16 %v139
  %v551 = vunpack.c.h.b16 %v139
  %v552 = vunpack.c.l.b16 %v140
  %v553 = vunpack.c.h.b16 %v140
  %v554 = vunpack.c.l.b16 %v141
  %v555 = vunpack.c.h.b16 %v141
  %v556 = vunpack.c.l.b16 %v142
  %v557 = vunpack.c.h.b16 %v142
  %v558 = vunpack.c.l.b16 %v143
  %v559 = vunpack.c.h.b16 %v143
  %v560 = vunpack.c.l.b16 %v144
  %v561 = vunpack.c.h.b16 %v144
  %v562 = vunpack.c.l.b16 %v145
  %v563 = vunpack.c.h.b16 %v145
  %v564 = vunpack.c.l.b16 %v146
  %v565 = vunpack.c.h.b16 %v146
  %v566 = vunpack.c.l.b16 %v147
  %v567 = vunpack.c.h.b16 %v147
  %v568 = vunpack.c.l.b16 %v148
  %v569 = vunpack.c.h.b16 %v148
  %v570 = vunpack.c.l.b16 %v149
  %v571 = vunpack.c.h.b16 %v149
  %v572 = vunpack.c.l.b16 %v150
  %v573 = vunpack.c.h.b16 %v150
  %v574 = vunpack.c.l.b16 %v151
  %v575 = vunpack.c.h.b16 %v151
  %v576 = vunpack.c.l.b16 %v152
  %v577 = vunpack.c.h.b16 %v152
  %v578 = vunpack.c.l.b16 %v153
  %v579 = vunpack.c.h.b16 %v153
  %v580 = vpack.c.b16 %v332, %v324
  %v581 = vpack.c.b16 %v333, %v325
  %v582 = vpack.c.b16 %v334, %v326
  %v583 = vpack.c.b16 %v335, %v327
  %v584 = vpack.c.b16 %v336, %v328
  %v585 = vpack.c.b16 %v337, %v329
  %v586 = vpack.c.b16 %v338, %v330
  %v587 = vpack.c.b16 %v339, %v331
  %v588 = vpack.c.b16 %v348, %v340
  %v589 = vpack.c.b16 %v349, %v341
  %v590 = vpack.c.b16 %v350, %v342
  %v591 = vpack.c.b16 %v351, %v343
  %v592 = vpack.c.b16 %v352, %v344
  %v593 = vpack.c.b16 %v353, %v345
  %v594 = vpack.c.b16 %v354, %v346
  %v595 = vpack.c.b16 %v355, %v347
  %v596 = vpack.c.b16 %v364, %v356
  %v597 = vpack.c.b16 %v365, %v357
  %v598 = vpack.c.b16 %v366, %v358
  %v599 = vpack.c.b16 %v367, %v359
  %v600 = vpack.c.b16 %v368, %v360
  %v601 = vpack.c.b16 %v369, %v361
  %v602 = vpack.c.b16 %v370, %v362
  %v603 = vpack.c.b16 %v371, %v363
  %v604 = vpack.c.b16 %v380, %v372
  %v605 = vpack.c.b16 %v381, %v373
  %v606 = vpack.c.b16 %v382, %v374
  %v607 = vpack.c.b16 %v383, %v375
  %v608 = vpack.c.b16 %v384, %v376
  %v609 = vpack.c.b16 %v385, %v377
  %v610 = vpack.c.b16 %v386, %v378
  %v611 = vpack.c.b16 %v387, %v379
  %v612 = vpack.c.b16 %v396, %v388
  %v613 = vpack.c.b16 %v397, %v389
  %v614 = vpack.c.b16 %v398, %v390
  %v615 = vpack.c.b16 %v399, %v391
  %v616 = vpack.c.b16 %v400, %v392
  %v617 = vpack.c.b16 %v401, %v393
  %v618 = vpack.c.b16 %v402, %v394
  %v619 = vpack.c.b16 %v403, %v395
  %v620 = vpack.c.b16 %v412, %v404
  %v621 = vpack.c.b16 %v413, %v405
  %v622 = vpack.c.b16 %v414, %v406
  %v623 = vpack.c.b16 %v415, %v407
  %v624 = vpack.c.b16 %v416, %v408
  %v625 = vpack.c.b16 %v417, %v409
  %v626 = vpack.c.b16 %v418, %v410
  %v627 = vpack.c.b16 %v419, %v411
  %v628 = vpack.c.b16 %v428, %v420
  %v629 = vpack.c.b16 %v429, %v421
  %v630 = vpack.c.b16 %v430, %v422
  %v631 = vpack.c.b16 %v431, %v423
  %v632 = vpack.c.b16 %v432, %v424
  %v633 = vpack.c.b16 %v433, %v425
  %v634 = vpack.c.b16 %v434, %v426
  %v635 = vpack.c.b16 %v435, %v427
  %v636 = vpack.c.b16 %v444, %v436
  %v637 = vpack.c.b16 %v445, %v437
  %v638 = vpack.c.b16 %v446, %v438
  %v639 = vpack.c.b16 %v447, %v439
  %v640 = vpack.c.b16 %v448, %v440
  %v641 = vpack.c.b16 %v449, %v441
  %v642 = vpack.c.b16 %v450, %v442
  %v643 = vpack.c.b16 %v451, %v443
  %v644 = vpack.c.b16 %v460, %v452
  %v645 = vpack.c.b16 %v461, %v453
  %v646 = vpack.c.b16 %v462, %v454
  %v647 = vpack.c.b16 %v463, %v455
  %v648 = vpack.c.b16 %v464, %v456
  %v649 = vpack.c.b16 %v465, %v457
  %v650 = vpack.c.b16 %v466, %v458
  %v651 = vpack.c.b16 %v467, %v459
  %v652 = vpack.c.b16 %v476, %v468
  %v653 = vpack.c.b16 %v477, %v469
  %v654 = vpack.c.b16 %v478, %v470
  %v655 = vpack.c.b16 %v479, %v471
  %v656 = vpack.c.b16 %v480, %v472
  %v657 = vpack.c.b16 %v481, %v473
  %v658 = vpack.c.b16 %v482, %v474
  %v659 = vpack.c.b16 %v483, %v475
  %v660 = vpack.c.b16 %v492, %v484
  %v661 = vpack.c.b16 %v493, %v485
  %v662 = vpack.c.b16 %v494, %v486
  %v663 = vpack.c.b16 %v495, %v487
  %v664 = vpack.c.b16 %v496, %v488
  %v665 = vpack.c.b16 %v497, %v489
  %v666 = vpack.c.b16 %v498, %v490
  %v667 = vpack.c.b16 %v499, %v491
  %v668 = vpack.c.b16 %v508, %v500
  %v669 = vpack.c.b16 %v509, %v501
  %v670 = vpack.c.b16 %v510, %v502
  %v671 = vpack.c.b16 %v511, %v503
  %v672 = vpack.c.b16 %v512, %v504
  %v673 = vpack.c.b16 %v513, %v505
  %v674 = vpack.c.b16 %v514, %v506
  %v675 = vpack.c.b16 %v515, %v507
  %v676 = vpack.c.b16 %v524, %v516
  %v677 = vpack.c.b16 %v525, %v517
  %v678 = vpack.c.b16 %v526, %v518
  %v679 = vpack.c.b16 %v527, %v519
  %v680 = vpack.c.b16 %v528, %v520
  %v681 = vpack.c.b16 %v529, %v521
  %v682 = vpack.c.b16 %v530, %v522
  %v683 = vpack.c.b16 %v531, %v523
  %v684 = vpack.c.b16 %v540, %v532
  %v685 = vpack.c.b16 %v541, %v533
  %v686 = vpack.c.b16 %v542, %v534
  %v687 = vpack.c.b16 %v543, %v535
  %v688 = vpack.c.b16 %v544, %v536
  %v689 = vpack.c.b16 %v545, %v537
  %v690 = vpack.c.b16 %v546, %v538
  %v691 = vpack.c.b16 %v547, %v539
  %v692 = vpack.c.b16 %v556, %v548
  %v693 = vpack.c.b16 %v557, %v549
  %v694 = vpack.c.b16 %v558, %v550
  %v695 = vpack.c.b16 %v559, %v551
  %v696 = vpack.c.b16 %v560, %v552
  %v697 = vpack.c.b16 %v561, %v553
  %v698 = vpack.c.b16 %v562, %v554
  %v699 = vpack.c.b16 %v563, %v555
  %v700 = vpack.c.b16 %v572, %v564
  %v701 = vpack.c.b16 %v573, %v565
  %v702 = vpack.c.b16 %v574, %v566
  %v703 = vpack.c.b16 %v575, %v567
  %v704 = vpack.c.b16 %v576, %v568
  %v705 = vpack.c.b16 %v577, %v569
  %v706 = vpack.c.b16 %v578, %v570
  %v707 = vpack.c.b16 %v579, %v571
  %836 = vmatprep.subr.bf16.mxu0 %v581
  %837 = vmatpush1.bf16.msra.mxu0 %v580
  %838 = vmatprep.subr.bf16.mxu0 %v589
  %839 = vmatpush1.bf16.msra.mxu0 %v588
  %840 = vmatprep.subr.bf16.mxu0 %v597
  %841 = vmatpush1.bf16.msra.mxu0 %v596
  %842 = vmatprep.subr.bf16.mxu0 %v605
  %843 = vmatpush1.bf16.msra.mxu0 %v604
  %844 = vmatprep.subr.bf16.mxu0 %v613
  %845 = vmatpush1.bf16.msra.mxu0 %v612
  %846 = vmatprep.subr.bf16.mxu0 %v621
  %847 = vmatpush1.bf16.msra.mxu0 %v620
  %848 = vmatprep.subr.bf16.mxu0 %v629
  %849 = vmatpush1.bf16.msra.mxu0 %v628
  %850 = vmatprep.subr.bf16.mxu0 %v637
  %851 = vmatpush1.bf16.msra.mxu0 %v636
  %852 = vmatprep.subr.bf16.mxu0 %v645
  %853 = vmatpush1.bf16.msra.mxu0 %v644
  %854 = vmatprep.subr.bf16.mxu0 %v653
  %855 = vmatpush1.bf16.msra.mxu0 %v652
  %856 = vmatprep.subr.bf16.mxu0 %v661
  %857 = vmatpush1.bf16.msra.mxu0 %v660
  %858 = vmatprep.subr.bf16.mxu0 %v669
  %859 = vmatpush1.bf16.msra.mxu0 %v668
  %860 = vmatprep.subr.bf16.mxu0 %v677
  %861 = vmatpush1.bf16.msra.mxu0 %v676
  %862 = vmatprep.subr.bf16.mxu0 %v685
  %863 = vmatpush1.bf16.msra.mxu0 %v684
  %864 = vmatprep.subr.bf16.mxu0 %v693
  %865 = vmatpush1.bf16.msra.mxu0 %v692
  %866 = vmatprep.subr.bf16.mxu0 %v701
  %867 = vmatpush1.bf16.msra.mxu0 %v700
  %868 = vmatprep.mubr.bf16.mxu0 %v25
  %869 = vmatmul.mubr.bf16.gmra.mrb[0].mxu0 %v24
  %v870 = vpop.f32.mrb[0].mxu0
  %v871 = vadd.f32 %v159, %v870
  %v872 = vpop.f32.mrb[0].mxu0
  %v873 = vadd.f32 %v163, %v872
  %v874 = vpop.f32.mrb[0].mxu0
  %v875 = vadd.f32 %v159, %v874
  %v876 = vpop.f32.mrb[0].mxu0
  %v877 = vadd.f32 %v163, %v876
  %878 = vdwg.mxu0
  %879 = vmatprep.subr.bf16.mxu0 %v583
  %880 = vmatpush1.bf16.msra.mxu0 %v582
  %881 = vmatprep.subr.bf16.mxu0 %v591
  %882 = vmatpush1.bf16.msra.mxu0 %v590
  %883 = vmatprep.subr.bf16.mxu0 %v599
  %884 = vmatpush1.bf16.msra.mxu0 %v598
  %885 = vmatprep.subr.bf16.mxu0 %v607
  %886 = vmatpush1.bf16.msra.mxu0 %v606
  %887 = vmatprep.subr.bf16.mxu0 %v615
  %888 = vmatpush1.bf16.msra.mxu0 %v614
  %889 = vmatprep.subr.bf16.mxu0 %v623
  %890 = vmatpush1.bf16.msra.mxu0 %v622
  %891 = vmatprep.subr.bf16.mxu0 %v631
  %892 = vmatpush1.bf16.msra.mxu0 %v630
  %893 = vmatprep.subr.bf16.mxu0 %v639
  %894 = vmatpush1.bf16.msra.mxu0 %v638
  %895 = vmatprep.subr.bf16.mxu0 %v647
  %896 = vmatpush1.bf16.msra.mxu0 %v646
  %897 = vmatprep.subr.bf16.mxu0 %v655
  %898 = vmatpush1.bf16.msra.mxu0 %v654
  %899 = vmatprep.subr.bf16.mxu0 %v663
  %900 = vmatpush1.bf16.msra.mxu0 %v662
  %901 = vmatprep.subr.bf16.mxu0 %v671
  %902 = vmatpush1.bf16.msra.mxu0 %v670
  %903 = vmatprep.subr.bf16.mxu0 %v679
  %904 = vmatpush1.bf16.msra.mxu0 %v678
  %905 = vmatprep.subr.bf16.mxu0 %v687
  %906 = vmatpush1.bf16.msra.mxu0 %v686
  %907 = vmatprep.subr.bf16.mxu0 %v695
  %908 = vmatpush1.bf16.msra.mxu0 %v694
  %909 = vmatprep.subr.bf16.mxu0 %v703
  %910 = vmatpush1.bf16.msra.mxu0 %v702
  %911 = vmatprep.mubr.bf16.mxu0 %v25
  %912 = vmatmul.mubr.bf16.gmra.mrb[0].mxu0 %v24
  %v913 = vpop.f32.mrb[0].mxu0
  %v914 = vadd.f32 %v167, %v913
  %v915 = vpop.f32.mrb[0].mxu0
  %v916 = vadd.f32 %v171, %v915
  %v917 = vpop.f32.mrb[0].mxu0
  %v918 = vadd.f32 %v167, %v917
  %v919 = vpop.f32.mrb[0].mxu0
  %v920 = vadd.f32 %v171, %v919
  %921 = vdwg.mxu0
  %922 = vmatprep.subr.bf16.mxu0 %v585
  %923 = vmatpush1.bf16.msra.mxu0 %v584
  %924 = vmatprep.subr.bf16.mxu0 %v593
  %925 = vmatpush1.bf16.msra.mxu0 %v592
  %926 = vmatprep.subr.bf16.mxu0 %v601
  %927 = vmatpush1.bf16.msra.mxu0 %v600
  %928 = vmatprep.subr.bf16.mxu0 %v609
  %929 = vmatpush1.bf16.msra.mxu0 %v608
  %930 = vmatprep.subr.bf16.mxu0 %v617
  %931 = vmatpush1.bf16.msra.mxu0 %v616
  %932 = vmatprep.subr.bf16.mxu0 %v625
  %933 = vmatpush1.bf16.msra.mxu0 %v624
  %934 = vmatprep.subr.bf16.mxu0 %v633
  %935 = vmatpush1.bf16.msra.mxu0 %v632
  %936 = vmatprep.subr.bf16.mxu0 %v641
  %937 = vmatpush1.bf16.msra.mxu0 %v640
  %938 = vmatprep.subr.bf16.mxu0 %v649
  %939 = vmatpush1.bf16.msra.mxu0 %v648
  %940 = vmatprep.subr.bf16.mxu0 %v657
  %941 = vmatpush1.bf16.msra.mxu0 %v656
  %942 = vmatprep.subr.bf16.mxu0 %v665
  %943 = vmatpush1.bf16.msra.mxu0 %v664
  %944 = vmatprep.subr.bf16.mxu0 %v673
  %945 = vmatpush1.bf16.msra.mxu0 %v672
  %946 = vmatprep.subr.bf16.mxu0 %v681
  %947 = vmatpush1.bf16.msra.mxu0 %v680
  %948 = vmatprep.subr.bf16.mxu0 %v689
  %949 = vmatpush1.bf16.msra.mxu0 %v688
  %950 = vmatprep.subr.bf16.mxu0 %v697
  %951 = vmatpush1.bf16.msra.mxu0 %v696
  %952 = vmatprep.subr.bf16.mxu0 %v705
  %953 = vmatpush1.bf16.msra.mxu0 %v704
  %954 = vmatprep.mubr.bf16.mxu0 %v25
  %955 = vmatmul.mubr.bf16.gmra.mrb[0].mxu0 %v24
  %v956 = vpop.f32.mrb[0].mxu0
  %v957 = vadd.f32 %v175, %v956
  %v958 = vpop.f32.mrb[0].mxu0
  %v959 = vadd.f32 %v179, %v958
  %v960 = vpop.f32.mrb[0].mxu0
  %v961 = vadd.f32 %v175, %v960
  %v962 = vpop.f32.mrb[0].mxu0
  %v963 = vadd.f32 %v179, %v962
  %964 = vdwg.mxu0
  %965 = vmatprep.subr.bf16.mxu0 %v587
  %966 = vmatpush1.bf16.msra.mxu0 %v586
  %967 = vmatprep.subr.bf16.mxu0 %v595
  %968 = vmatpush1.bf16.msra.mxu0 %v594
  %969 = vmatprep.subr.bf16.mxu0 %v603
  %970 = vmatpush1.bf16.msra.mxu0 %v602
  %971 = vmatprep.subr.bf16.mxu0 %v611
  %972 = vmatpush1.bf16.msra.mxu0 %v610
  %973 = vmatprep.subr.bf16.mxu0 %v619
  %974 = vmatpush1.bf16.msra.mxu0 %v618
  %975 = vmatprep.subr.bf16.mxu0 %v627
  %976 = vmatpush1.bf16.msra.mxu0 %v626
  %977 = vmatprep.subr.bf16.mxu0 %v635
  %978 = vmatpush1.bf16.msra.mxu0 %v634
  %979 = vmatprep.subr.bf16.mxu0 %v643
  %980 = vmatpush1.bf16.msra.mxu0 %v642
  %981 = vmatprep.subr.bf16.mxu0 %v651
  %982 = vmatpush1.bf16.msra.mxu0 %v650
  %983 = vmatprep.subr.bf16.mxu0 %v659
  %984 = vmatpush1.bf16.msra.mxu0 %v658
  %985 = vmatprep.subr.bf16.mxu0 %v667
  %986 = vmatpush1.bf16.msra.mxu0 %v666
  %987 = vmatprep.subr.bf16.mxu0 %v675
  %988 = vmatpush1.bf16.msra.mxu0 %v674
  %989 = vmatprep.subr.bf16.mxu0 %v683
  %990 = vmatpush1.bf16.msra.mxu0 %v682
  %991 = vmatprep.subr.bf16.mxu0 %v691
  %992 = vmatpush1.bf16.msra.mxu0 %v690
  %993 = vmatprep.subr.bf16.mxu0 %v699
  %994 = vmatpush1.bf16.msra.mxu0 %v698
  %995 = vmatprep.subr.bf16.mxu0 %v707
  %996 = vmatpush1.bf16.msra.mxu0 %v706
  %997 = vmatprep.mubr.bf16.mxu0 %v25
  %998 = vmatmul.mubr.bf16.gmra.mrb[0].mxu0 %v24
  %v999 = vpop.f32.mrb[0].mxu0
  %v1000 = vadd.f32 %v183, %v999
  %v1001 = vpop.f32.mrb[0].mxu0
  %v1002 = vadd.f32 %v187, %v1001
  %v1003 = vpop.f32.mrb[0].mxu0
  %v1004 = vadd.f32 %v183, %v1003
  %v1005 = vpop.f32.mrb[0].mxu0
  %v1006 = vadd.f32 %v187, %v1005
  %1007 = vdwg.mxu0
  %v1008 = vmax.f32 %v871, 0.0
  %v1009 = vmax.f32 %v873, 0.0
  %v1010 = vmax.f32 %v914, 0.0
  %v1011 = vmax.f32 %v916, 0.0
  %v1012 = vmax.f32 %v957, 0.0
  %v1013 = vmax.f32 %v959, 0.0
  %v1014 = vmax.f32 %v1000, 0.0
  %v1015 = vmax.f32 %v1002, 0.0
  %v1016 = vmax.f32 %v875, 0.0
  %v1017 = vmax.f32 %v877, 0.0
  %v1018 = vmax.f32 %v918, 0.0
  %v1019 = vmax.f32 %v920, 0.0
  %v1020 = vmax.f32 %v961, 0.0
  %v1021 = vmax.f32 %v963, 0.0
  %v1022 = vmax.f32 %v1004, 0.0
  %v1023 = vmax.f32 %v1006, 0.0
  %v1024 = vpack.c.bf16 %v1016, %v1008
  %v1025 = vpack.c.bf16 %v1017, %v1009
  %v1026 = vpack.c.bf16 %v1018, %v1010
  %v1027 = vpack.c.bf16 %v1019, %v1011
  %v1028 = vpack.c.bf16 %v1020, %v1012
  %v1029 = vpack.c.bf16 %v1021, %v1013
  %v1030 = vpack.c.bf16 %v1022, %v1014
  %v1031 = vpack.c.bf16 %v1023, %v1015
  %v1032 = vld [vmem:[%s3] sm:$0xff]
  %v1033 = vld [vmem:[%s3 + $0x8] sm:$0xff]
  %v1034 = vld [vmem:[%s3 + $0x10] sm:$0xff]
  %v1035 = vld [vmem:[%s3 + $0x18] sm:$0xff]
  %v1036 = vld [vmem:[%s3 + $0x20] sm:$0xff]
  %v1037 = vld [vmem:[%s3 + $0x28] sm:$0xff]
  %v1038 = vld [vmem:[%s3 + $0x30] sm:$0xff]
  %v1039 = vld [vmem:[%s3 + $0x38] sm:$0xff]
  %v1040 = vld [vmem:[%s3 + $0x40] sm:$0xff]
  %v1041 = vld [vmem:[%s3 + $0x48] sm:$0xff]
  %v1042 = vld [vmem:[%s3 + $0x50] sm:$0xff]
  %v1043 = vld [vmem:[%s3 + $0x58] sm:$0xff]
  %v1044 = vld [vmem:[%s3 + $0x60] sm:$0xff]
  %v1045 = vld [vmem:[%s3 + $0x68] sm:$0xff]
  %v1046 = vld [vmem:[%s3 + $0x70] sm:$0xff]
  %v1047 = vld [vmem:[%s3 + $0x78] sm:$0xff]
  %v1048 = vld [vmem:[%s3 + $0x80] sm:$0xff]
  %v1049 = vld [vmem:[%s3 + $0x88] sm:$0xff]
  %v1050 = vld [vmem:[%s3 + $0x90] sm:$0xff]
  %v1051 = vld [vmem:[%s3 + $0x98] sm:$0xff]
  %v1052 = vld [vmem:[%s3 + $0xa0] sm:$0xff]
  %v1053 = vld [vmem:[%s3 + $0xa8] sm:$0xff]
  %v1054 = vld [vmem:[%s3 + $0xb0] sm:$0xff]
  %v1055 = vld [vmem:[%s3 + $0xb8] sm:$0xff]
  %v1056 = vld [vmem:[%s3 + $0xc0] sm:$0xff]
  %v1057 = vld [vmem:[%s3 + $0xc8] sm:$0xff]
  %v1058 = vld [vmem:[%s3 + $0xd0] sm:$0xff]
  %v1059 = vld [vmem:[%s3 + $0xd8] sm:$0xff]
  %v1060 = vld [vmem:[%s3 + $0xe0] sm:$0xff]
  %v1061 = vld [vmem:[%s3 + $0xe8] sm:$0xff]
  %v1062 = vld [vmem:[%s3 + $0xf0] sm:$0xff]
  %v1063 = vld [vmem:[%s3 + $0xf8] sm:$0xff]
  %v1064 = vld [vmem:[%s3 + $0x100] sm:$0xff]
  %v1065 = vld [vmem:[%s3 + $0x108] sm:$0xff]
  %v1066 = vld [vmem:[%s3 + $0x110] sm:$0xff]
  %v1067 = vld [vmem:[%s3 + $0x118] sm:$0xff]
  %v1068 = vld [vmem:[%s3 + $0x120] sm:$0xff]
  %v1069 = vld [vmem:[%s3 + $0x128] sm:$0xff]
  %v1070 = vld [vmem:[%s3 + $0x130] sm:$0xff]
  %v1071 = vld [vmem:[%s3 + $0x138] sm:$0xff]
  %v1072 = vld [vmem:[%s3 + $0x140] sm:$0xff]
  %v1073 = vld [vmem:[%s3 + $0x148] sm:$0xff]
  %v1074 = vld [vmem:[%s3 + $0x150] sm:$0xff]
  %v1075 = vld [vmem:[%s3 + $0x158] sm:$0xff]
  %v1076 = vld [vmem:[%s3 + $0x160] sm:$0xff]
  %v1077 = vld [vmem:[%s3 + $0x168] sm:$0xff]
  %v1078 = vld [vmem:[%s3 + $0x170] sm:$0xff]
  %v1079 = vld [vmem:[%s3 + $0x178] sm:$0xff]
  %v1080 = vld [vmem:[%s3 + $0x180] sm:$0xff]
  %v1081 = vld [vmem:[%s3 + $0x188] sm:$0xff]
  %v1082 = vld [vmem:[%s3 + $0x190] sm:$0xff]
  %v1083 = vld [vmem:[%s3 + $0x198] sm:$0xff]
  %v1084 = vld [vmem:[%s3 + $0x1a0] sm:$0xff]
  %v1085 = vld [vmem:[%s3 + $0x1a8] sm:$0xff]
  %v1086 = vld [vmem:[%s3 + $0x1b0] sm:$0xff]
  %v1087 = vld [vmem:[%s3 + $0x1b8] sm:$0xff]
  %v1088 = vld [vmem:[%s3 + $0x1c0] sm:$0xff]
  %v1089 = vld [vmem:[%s3 + $0x1c8] sm:$0xff]
  %v1090 = vld [vmem:[%s3 + $0x1d0] sm:$0xff]
  %v1091 = vld [vmem:[%s3 + $0x1d8] sm:$0xff]
  %v1092 = vld [vmem:[%s3 + $0x1e0] sm:$0xff]
  %v1093 = vld [vmem:[%s3 + $0x1e8] sm:$0xff]
  %v1094 = vld [vmem:[%s3 + $0x1f0] sm:$0xff]
  %v1095 = vld [vmem:[%s3 + $0x1f8] sm:$0xff]
  %v1096 = vld [vmem:[%s3 + $0x200] sm:$0xff]
  %v1097 = vld [vmem:[%s3 + $0x208] sm:$0xff]
  %v1098 = vld [vmem:[%s3 + $0x210] sm:$0xff]
  %v1099 = vld [vmem:[%s3 + $0x218] sm:$0xff]
  %v1100 = vld [vmem:[%s3 + $0x220] sm:$0xff]
  %v1101 = vld [vmem:[%s3 + $0x228] sm:$0xff]
  %v1102 = vld [vmem:[%s3 + $0x230] sm:$0xff]
  %v1103 = vld [vmem:[%s3 + $0x238] sm:$0xff]
  %v1104 = vld [vmem:[%s3 + $0x240] sm:$0xff]
  %v1105 = vld [vmem:[%s3 + $0x248] sm:$0xff]
  %v1106 = vld [vmem:[%s3 + $0x250] sm:$0xff]
  %v1107 = vld [vmem:[%s3 + $0x258] sm:$0xff]
  %v1108 = vld [vmem:[%s3 + $0x260] sm:$0xff]
  %v1109 = vld [vmem:[%s3 + $0x268] sm:$0xff]
  %v1110 = vld [vmem:[%s3 + $0x270] sm:$0xff]
  %v1111 = vld [vmem:[%s3 + $0x278] sm:$0xff]
  %v1112 = vld [vmem:[%s3 + $0x280] sm:$0xff]
  %v1113 = vld [vmem:[%s3 + $0x288] sm:$0xff]
  %v1114 = vld [vmem:[%s3 + $0x290] sm:$0xff]
  %v1115 = vld [vmem:[%s3 + $0x298] sm:$0xff]
  %v1116 = vld [vmem:[%s3 + $0x2a0] sm:$0xff]
  %v1117 = vld [vmem:[%s3 + $0x2a8] sm:$0xff]
  %v1118 = vld [vmem:[%s3 + $0x2b0] sm:$0xff]
  %v1119 = vld [vmem:[%s3 + $0x2b8] sm:$0xff]
  %v1120 = vld [vmem:[%s3 + $0x2c0] sm:$0xff]
  %v1121 = vld [vmem:[%s3 + $0x2c8] sm:$0xff]
  %v1122 = vld [vmem:[%s3 + $0x2d0] sm:$0xff]
  %v1123 = vld [vmem:[%s3 + $0x2d8] sm:$0xff]
  %v1124 = vld [vmem:[%s3 + $0x2e0] sm:$0xff]
  %v1125 = vld [vmem:[%s3 + $0x2e8] sm:$0xff]
  %v1126 = vld [vmem:[%s3 + $0x2f0] sm:$0xff]
  %v1127 = vld [vmem:[%s3 + $0x2f8] sm:$0xff]
  %v1128 = vld [vmem:[%s3 + $0x300] sm:$0xff]
  %v1129 = vld [vmem:[%s3 + $0x308] sm:$0xff]
  %v1130 = vld [vmem:[%s3 + $0x310] sm:$0xff]
  %v1131 = vld [vmem:[%s3 + $0x318] sm:$0xff]
  %v1132 = vld [vmem:[%s3 + $0x320] sm:$0xff]
  %v1133 = vld [vmem:[%s3 + $0x328] sm:$0xff]
  %v1134 = vld [vmem:[%s3 + $0x330] sm:$0xff]
  %v1135 = vld [vmem:[%s3 + $0x338] sm:$0xff]
  %v1136 = vld [vmem:[%s3 + $0x340] sm:$0xff]
  %v1137 = vld [vmem:[%s3 + $0x348] sm:$0xff]
  %v1138 = vld [vmem:[%s3 + $0x350] sm:$0xff]
  %v1139 = vld [vmem:[%s3 + $0x358] sm:$0xff]
  %v1140 = vld [vmem:[%s3 + $0x360] sm:$0xff]
  %v1141 = vld [vmem:[%s3 + $0x368] sm:$0xff]
  %v1142 = vld [vmem:[%s3 + $0x370] sm:$0xff]
  %v1143 = vld [vmem:[%s3 + $0x378] sm:$0xff]
  %v1144 = vld [vmem:[%s3 + $0x380] sm:$0xff]
  %v1145 = vld [vmem:[%s3 + $0x388] sm:$0xff]
  %v1146 = vld [vmem:[%s3 + $0x390] sm:$0xff]
  %v1147 = vld [vmem:[%s3 + $0x398] sm:$0xff]
  %v1148 = vld [vmem:[%s3 + $0x3a0] sm:$0xff]
  %v1149 = vld [vmem:[%s3 + $0x3a8] sm:$0xff]
  %v1150 = vld [vmem:[%s3 + $0x3b0] sm:$0xff]
  %v1151 = vld [vmem:[%s3 + $0x3b8] sm:$0xff]
  %v1152 = vld [vmem:[%s3 + $0x3c0] sm:$0xff]
  %v1153 = vld [vmem:[%s3 + $0x3c8] sm:$0xff]
  %v1154 = vld [vmem:[%s3 + $0x3d0] sm:$0xff]
  %v1155 = vld [vmem:[%s3 + $0x3d8] sm:$0xff]
  %v1156 = vld [vmem:[%s3 + $0x3e0] sm:$0xff]
  %v1157 = vld [vmem:[%s3 + $0x3e8] sm:$0xff]
  %v1158 = vld [vmem:[%s3 + $0x3f0] sm:$0xff]
  %v1159 = vld [vmem:[%s3 + $0x3f8] sm:$0xff]
  %v1160 = vld [vmem:[%s4] sm:$0x3]
  %v1162 = vlaneseq
  %v1163 = vshrl.u32 %v1162, 7
  %v1164 = vsub.s32 0, %v1163
  %v1165 = vrot.slane %v1160, %v1164
  %v1166 = vlaneseq
  %v1167 = vshrl.u32 %v1166, 7
  %v1168 = vsub.s32 1, %v1167
  %v1169 = vrot.slane %v1160, %v1168
  %v1300 = vunpack.c.l.b16 %v1032
  %v1301 = vunpack.c.h.b16 %v1032
  %v1302 = vunpack.c.l.b16 %v1033
  %v1303 = vunpack.c.h.b16 %v1033
  %v1304 = vunpack.c.l.b16 %v1034
  %v1305 = vunpack.c.h.b16 %v1034
  %v1306 = vunpack.c.l.b16 %v1035
  %v1307 = vunpack.c.h.b16 %v1035
  %v1308 = vunpack.c.l.b16 %v1036
  %v1309 = vunpack.c.h.b16 %v1036
  %v1310 = vunpack.c.l.b16 %v1037
  %v1311 = vunpack.c.h.b16 %v1037
  %v1312 = vunpack.c.l.b16 %v1038
  %v1313 = vunpack.c.h.b16 %v1038
  %v1314 = vunpack.c.l.b16 %v1039
  %v1315 = vunpack.c.h.b16 %v1039
  %v1316 = vunpack.c.l.b16 %v1040
  %v1317 = vunpack.c.h.b16 %v1040
  %v1318 = vunpack.c.l.b16 %v1041
  %v1319 = vunpack.c.h.b16 %v1041
  %v1320 = vunpack.c.l.b16 %v1042
  %v1321 = vunpack.c.h.b16 %v1042
  %v1322 = vunpack.c.l.b16 %v1043
  %v1323 = vunpack.c.h.b16 %v1043
  %v1324 = vunpack.c.l.b16 %v1044
  %v1325 = vunpack.c.h.b16 %v1044
  %v1326 = vunpack.c.l.b16 %v1045
  %v1327 = vunpack.c.h.b16 %v1045
  %v1328 = vunpack.c.l.b16 %v1046
  %v1329 = vunpack.c.h.b16 %v1046
  %v1330 = vunpack.c.l.b16 %v1047
  %v1331 = vunpack.c.h.b16 %v1047
  %v1332 = vunpack.c.l.b16 %v1048
  %v1333 = vunpack.c.h.b16 %v1048
  %v1334 = vunpack.c.l.b16 %v1049
  %v1335 = vunpack.c.h.b16 %v1049
  %v1336 = vunpack.c.l.b16 %v1050
  %v1337 = vunpack.c.h.b16 %v1050
  %v1338 = vunpack.c.l.b16 %v1051
  %v1339 = vunpack.c.h.b16 %v1051
  %v1340 = vunpack.c.l.b16 %v1052
  %v1341 = vunpack.c.h.b16 %v1052
  %v1342 = vunpack.c.l.b16 %v1053
  %v1343 = vunpack.c.h.b16 %v1053
  %v1344 = vunpack.c.l.b16 %v1054
  %v1345 = vunpack.c.h.b16 %v1054
  %v1346 = vunpack.c.l.b16 %v1055
  %v1347 = vunpack.c.h.b16 %v1055
  %v1348 = vunpack.c.l.b16 %v1056
  %v1349 = vunpack.c.h.b16 %v1056
  %v1350 = vunpack.c.l.b16 %v1057
  %v1351 = vunpack.c.h.b16 %v1057
  %v1352 = vunpack.c.l.b16 %v1058
  %v1353 = vunpack.c.h.b16 %v1058
  %v1354 = vunpack.c.l.b16 %v1059
  %v1355 = vunpack.c.h.b16 %v1059
  %v1356 = vunpack.c.l.b16 %v1060
  %v1357 = vunpack.c.h.b16 %v1060
  %v1358 = vunpack.c.l.b16 %v1061
  %v1359 = vunpack.c.h.b16 %v1061
  %v1360 = vunpack.c.l.b16 %v1062
  %v1361 = vunpack.c.h.b16 %v1062
  %v1362 = vunpack.c.l.b16 %v1063
  %v1363 = vunpack.c.h.b16 %v1063
  %v1364 = vunpack.c.l.b16 %v1064
  %v1365 = vunpack.c.h.b16 %v1064
  %v1366 = vunpack.c.l.b16 %v1065
  %v1367 = vunpack.c.h.b16 %v1065
  %v1368 = vunpack.c.l.b16 %v1066
  %v1369 = vunpack.c.h.b16 %v1066
  %v1370 = vunpack.c.l.b16 %v1067
  %v1371 = vunpack.c.h.b16 %v1067
  %v1372 = vunpack.c.l.b16 %v1068
  %v1373 = vunpack.c.h.b16 %v1068
  %v1374 = vunpack.c.l.b16 %v1069
  %v1375 = vunpack.c.h.b16 %v1069
  %v1376 = vunpack.c.l.b16 %v1070
  %v1377 = vunpack.c.h.b16 %v1070
  %v1378 = vunpack.c.l.b16 %v1071
  %v1379 = vunpack.c.h.b16 %v1071
  %v1380 = vunpack.c.l.b16 %v1072
  %v1381 = vunpack.c.h.b16 %v1072
  %v1382 = vunpack.c.l.b16 %v1073
  %v1383 = vunpack.c.h.b16 %v1073
  %v1384 = vunpack.c.l.b16 %v1074
  %v1385 = vunpack.c.h.b16 %v1074
  %v1386 = vunpack.c.l.b16 %v1075
  %v1387 = vunpack.c.h.b16 %v1075
  %v1388 = vunpack.c.l.b16 %v1076
  %v1389 = vunpack.c.h.b16 %v1076
  %v1390 = vunpack.c.l.b16 %v1077
  %v1391 = vunpack.c.h.b16 %v1077
  %v1392 = vunpack.c.l.b16 %v1078
  %v1393 = vunpack.c.h.b16 %v1078
  %v1394 = vunpack.c.l.b16 %v1079
  %v1395 = vunpack.c.h.b16 %v1079
  %v1396 = vunpack.c.l.b16 %v1080
  %v1397 = vunpack.c.h.b16 %v1080
  %v1398 = vunpack.c.l.b16 %v1081
  %v1399 = vunpack.c.h.b16 %v1081
  %v1400 = vunpack.c.l.b16 %v1082
  %v1401 = vunpack.c.h.b16 %v1082
  %v1402 = vunpack.c.l.b16 %v1083
  %v1403 = vunpack.c.h.b16 %v1083
  %v1404 = vunpack.c.l.b16 %v1084
  %v1405 = vunpack.c.h.b16 %v1084
  %v1406 = vunpack.c.l.b16 %v1085
  %v1407 = vunpack.c.h.b16 %v1085
  %v1408 = vunpack.c.l.b16 %v1086
  %v1409 = vunpack.c.h.b16 %v1086
  %v1410 = vunpack.c.l.b16 %v1087
  %v1411 = vunpack.c.h.b16 %v1087
  %v1412 = vunpack.c.l.b16 %v1088
  %v1413 = vunpack.c.h.b16 %v1088
  %v1414 = vunpack.c.l.b16 %v1089
  %v1415 = vunpack.c.h.b16 %v1089
  %v1416 = vunpack.c.l.b16 %v1090
  %v1417 = vunpack.c.h.b16 %v1090
  %v1418 = vunpack.c.l.b16 %v1091
  %v1419 = vunpack.c.h.b16 %v1091
  %v1420 = vunpack.c.l.b16 %v1092
  %v1421 = vunpack.c.h.b16 %v1092
  %v1422 = vunpack.c.l.b16 %v1093
  %v1423 = vunpack.c.h.b16 %v1093
  %v1424 = vunpack.c.l.b16 %v1094
  %v1425 = vunpack.c.h.b16 %v1094
  %v1426 = vunpack.c.l.b16 %v1095
  %v1427 = vunpack.c.h.b16 %v1095
  %v1428 = vunpack.c.l.b16 %v1096
  %v1429 = vunpack.c.h.b16 %v1096
  %v1430 = vunpack.c.l.b16 %v1097
  %v1431 = vunpack.c.h.b16 %v1097
  %v1432 = vunpack.c.l.b16 %v1098
  %v1433 = vunpack.c.h.b16 %v1098
  %v1434 = vunpack.c.l.b16 %v1099
  %v1435 = vunpack.c.h.b16 %v1099
  %v1436 = vunpack.c.l.b16 %v1100
  %v1437 = vunpack.c.h.b16 %v1100
  %v1438 = vunpack.c.l.b16 %v1101
  %v1439 = vunpack.c.h.b16 %v1101
  %v1440 = vunpack.c.l.b16 %v1102
  %v1441 = vunpack.c.h.b16 %v1102
  %v1442 = vunpack.c.l.b16 %v1103
  %v1443 = vunpack.c.h.b16 %v1103
  %v1444 = vunpack.c.l.b16 %v1104
  %v1445 = vunpack.c.h.b16 %v1104
  %v1446 = vunpack.c.l.b16 %v1105
  %v1447 = vunpack.c.h.b16 %v1105
  %v1448 = vunpack.c.l.b16 %v1106
  %v1449 = vunpack.c.h.b16 %v1106
  %v1450 = vunpack.c.l.b16 %v1107
  %v1451 = vunpack.c.h.b16 %v1107
  %v1452 = vunpack.c.l.b16 %v1108
  %v1453 = vunpack.c.h.b16 %v1108
  %v1454 = vunpack.c.l.b16 %v1109
  %v1455 = vunpack.c.h.b16 %v1109
  %v1456 = vunpack.c.l.b16 %v1110
  %v1457 = vunpack.c.h.b16 %v1110
  %v1458 = vunpack.c.l.b16 %v1111
  %v1459 = vunpack.c.h.b16 %v1111
  %v1460 = vunpack.c.l.b16 %v1112
  %v1461 = vunpack.c.h.b16 %v1112
  %v1462 = vunpack.c.l.b16 %v1113
  %v1463 = vunpack.c.h.b16 %v1113
  %v1464 = vunpack.c.l.b16 %v1114
  %v1465 = vunpack.c.h.b16 %v1114
  %v1466 = vunpack.c.l.b16 %v1115
  %v1467 = vunpack.c.h.b16 %v1115
  %v1468 = vunpack.c.l.b16 %v1116
  %v1469 = vunpack.c.h.b16 %v1116
  %v1470 = vunpack.c.l.b16 %v1117
  %v1471 = vunpack.c.h.b16 %v1117
  %v1472 = vunpack.c.l.b16 %v1118
  %v1473 = vunpack.c.h.b16 %v1118
  %v1474 = vunpack.c.l.b16 %v1119
  %v1475 = vunpack.c.h.b16 %v1119
  %v1476 = vunpack.c.l.b16 %v1120
  %v1477 = vunpack.c.h.b16 %v1120
  %v1478 = vunpack.c.l.b16 %v1121
  %v1479 = vunpack.c.h.b16 %v1121
  %v1480 = vunpack.c.l.b16 %v1122
  %v1481 = vunpack.c.h.b16 %v1122
  %v1482 = vunpack.c.l.b16 %v1123
  %v1483 = vunpack.c.h.b16 %v1123
  %v1484 = vunpack.c.l.b16 %v1124
  %v1485 = vunpack.c.h.b16 %v1124
  %v1486 = vunpack.c.l.b16 %v1125
  %v1487 = vunpack.c.h.b16 %v1125
  %v1488 = vunpack.c.l.b16 %v1126
  %v1489 = vunpack.c.h.b16 %v1126
  %v1490 = vunpack.c.l.b16 %v1127
  %v1491 = vunpack.c.h.b16 %v1127
  %v1492 = vunpack.c.l.b16 %v1128
  %v1493 = vunpack.c.h.b16 %v1128
  %v1494 = vunpack.c.l.b16 %v1129
  %v1495 = vunpack.c.h.b16 %v1129
  %v1496 = vunpack.c.l.b16 %v1130
  %v1497 = vunpack.c.h.b16 %v1130
  %v1498 = vunpack.c.l.b16 %v1131
  %v1499 = vunpack.c.h.b16 %v1131
  %v1500 = vunpack.c.l.b16 %v1132
  %v1501 = vunpack.c.h.b16 %v1132
  %v1502 = vunpack.c.l.b16 %v1133
  %v1503 = vunpack.c.h.b16 %v1133
  %v1504 = vunpack.c.l.b16 %v1134
  %v1505 = vunpack.c.h.b16 %v1134
  %v1506 = vunpack.c.l.b16 %v1135
  %v1507 = vunpack.c.h.b16 %v1135
  %v1508 = vunpack.c.l.b16 %v1136
  %v1509 = vunpack.c.h.b16 %v1136
  %v1510 = vunpack.c.l.b16 %v1137
  %v1511 = vunpack.c.h.b16 %v1137
  %v1512 = vunpack.c.l.b16 %v1138
  %v1513 = vunpack.c.h.b16 %v1138
  %v1514 = vunpack.c.l.b16 %v1139
  %v1515 = vunpack.c.h.b16 %v1139
  %v1516 = vunpack.c.l.b16 %v1140
  %v1517 = vunpack.c.h.b16 %v1140
  %v1518 = vunpack.c.l.b16 %v1141
  %v1519 = vunpack.c.h.b16 %v1141
  %v1520 = vunpack.c.l.b16 %v1142
  %v1521 = vunpack.c.h.b16 %v1142
  %v1522 = vunpack.c.l.b16 %v1143
  %v1523 = vunpack.c.h.b16 %v1143
  %v1524 = vunpack.c.l.b16 %v1144
  %v1525 = vunpack.c.h.b16 %v1144
  %v1526 = vunpack.c.l.b16 %v1145
  %v1527 = vunpack.c.h.b16 %v1145
  %v1528 = vunpack.c.l.b16 %v1146
  %v1529 = vunpack.c.h.b16 %v1146
  %v1530 = vunpack.c.l.b16 %v1147
  %v1531 = vunpack.c.h.b16 %v1147
  %v1532 = vunpack.c.l.b16 %v1148
  %v1533 = vunpack.c.h.b16 %v1148
  %v1534 = vunpack.c.l.b16 %v1149
  %v1535 = vunpack.c.h.b16 %v1149
  %v1536 = vunpack.c.l.b16 %v1150
  %v1537 = vunpack.c.h.b16 %v1150
  %v1538 = vunpack.c.l.b16 %v1151
  %v1539 = vunpack.c.h.b16 %v1151
  %v1540 = vunpack.c.l.b16 %v1152
  %v1541 = vunpack.c.h.b16 %v1152
  %v1542 = vunpack.c.l.b16 %v1153
  %v1543 = vunpack.c.h.b16 %v1153
  %v1544 = vunpack.c.l.b16 %v1154
  %v1545 = vunpack.c.h.b16 %v1154
  %v1546 = vunpack.c.l.b16 %v1155
  %v1547 = vunpack.c.h.b16 %v1155
  %v1548 = vunpack.c.l.b16 %v1156
  %v1549 = vunpack.c.h.b16 %v1156
  %v1550 = vunpack.c.l.b16 %v1157
  %v1551 = vunpack.c.h.b16 %v1157
  %v1552 = vunpack.c.l.b16 %v1158
  %v1553 = vunpack.c.h.b16 %v1158
  %v1554 = vunpack.c.l.b16 %v1159
  %v1555 = vunpack.c.h.b16 %v1159
  %v1556 = vpack.c.b16 %v1302, %v1300
  %v1557 = vpack.c.b16 %v1303, %v1301
  %v1558 = vpack.c.b16 %v1306, %v1304
  %v1559 = vpack.c.b16 %v1307, %v1305
  %v1560 = vpack.c.b16 %v1310, %v1308
  %v1561 = vpack.c.b16 %v1311, %v1309
  %v1562 = vpack.c.b16 %v1314, %v1312
  %v1563 = vpack.c.b16 %v1315, %v1313
  %v1564 = vpack.c.b16 %v1318, %v1316
  %v1565 = vpack.c.b16 %v1319, %v1317
  %v1566 = vpack.c.b16 %v1322, %v1320
  %v1567 = vpack.c.b16 %v1323, %v1321
  %v1568 = vpack.c.b16 %v1326, %v1324
  %v1569 = vpack.c.b16 %v1327, %v1325
  %v1570 = vpack.c.b16 %v1330, %v1328
  %v1571 = vpack.c.b16 %v1331, %v1329
  %v1572 = vpack.c.b16 %v1334, %v1332
  %v1573 = vpack.c.b16 %v1335, %v1333
  %v1574 = vpack.c.b16 %v1338, %v1336
  %v1575 = vpack.c.b16 %v1339, %v1337
  %v1576 = vpack.c.b16 %v1342, %v1340
  %v1577 = vpack.c.b16 %v1343, %v1341
  %v1578 = vpack.c.b16 %v1346, %v1344
  %v1579 = vpack.c.b16 %v1347, %v1345
  %v1580 = vpack.c.b16 %v1350, %v1348
  %v1581 = vpack.c.b16 %v1351, %v1349
  %v1582 = vpack.c.b16 %v1354, %v1352
  %v1583 = vpack.c.b16 %v1355, %v1353
  %v1584 = vpack.c.b16 %v1358, %v1356
  %v1585 = vpack.c.b16 %v1359, %v1357
  %v1586 = vpack.c.b16 %v1362, %v1360
  %v1587 = vpack.c.b16 %v1363, %v1361
  %v1588 = vpack.c.b16 %v1366, %v1364
  %v1589 = vpack.c.b16 %v1367, %v1365
  %v1590 = vpack.c.b16 %v1370, %v1368
  %v1591 = vpack.c.b16 %v1371, %v1369
  %v1592 = vpack.c.b16 %v1374, %v1372
  %v1593 = vpack.c.b16 %v1375, %v1373
  %v1594 = vpack.c.b16 %v1378, %v1376
  %v1595 = vpack.c.b16 %v1379, %v1377
  %v1596 = vpack.c.b16 %v1382, %v1380
  %v1597 = vpack.c.b16 %v1383, %v1381
  %v1598 = vpack.c.b16 %v1386, %v1384
  %v1599 = vpack.c.b16 %v1387, %v1385
  %v1600 = vpack.c.b16 %v1390, %v1388
  %v1601 = vpack.c.b16 %v1391, %v1389
  %v1602 = vpack.c.b16 %v1394, %v1392
  %v1603 = vpack.c.b16 %v1395, %v1393
  %v1604 = vpack.c.b16 %v1398, %v1396
  %v1605 = vpack.c.b16 %v1399, %v1397
  %v1606 = vpack.c.b16 %v1402, %v1400
  %v1607 = vpack.c.b16 %v1403, %v1401
  %v1608 = vpack.c.b16 %v1406, %v1404
  %v1609 = vpack.c.b16 %v1407, %v1405
  %v1610 = vpack.c.b16 %v1410, %v1408
  %v1611 = vpack.c.b16 %v1411, %v1409
  %v1612 = vpack.c.b16 %v1414, %v1412
  %v1613 = vpack.c.b16 %v1415, %v1413
  %v1614 = vpack.c.b16 %v1418, %v1416
  %v1615 = vpack.c.b16 %v1419, %v1417
  %v1616 = vpack.c.b16 %v1422, %v1420
  %v1617 = vpack.c.b16 %v1423, %v1421
  %v1618 = vpack.c.b16 %v1426, %v1424
  %v1619 = vpack.c.b16 %v1427, %v1425
  %v1620 = vpack.c.b16 %v1430, %v1428
  %v1621 = vpack.c.b16 %v1431, %v1429
  %v1622 = vpack.c.b16 %v1434, %v1432
  %v1623 = vpack.c.b16 %v1435, %v1433
  %v1624 = vpack.c.b16 %v1438, %v1436
  %v1625 = vpack.c.b16 %v1439, %v1437
  %v1626 = vpack.c.b16 %v1442, %v1440
  %v1627 = vpack.c.b16 %v1443, %v1441
  %v1628 = vpack.c.b16 %v1446, %v1444
  %v1629 = vpack.c.b16 %v1447, %v1445
  %v1630 = vpack.c.b16 %v1450, %v1448
  %v1631 = vpack.c.b16 %v1451, %v1449
  %v1632 = vpack.c.b16 %v1454, %v1452
  %v1633 = vpack.c.b16 %v1455, %v1453
  %v1634 = vpack.c.b16 %v1458, %v1456
  %v1635 = vpack.c.b16 %v1459, %v1457
  %v1636 = vpack.c.b16 %v1462, %v1460
  %v1637 = vpack.c.b16 %v1463, %v1461
  %v1638 = vpack.c.b16 %v1466, %v1464
  %v1639 = vpack.c.b16 %v1467, %v1465
  %v1640 = vpack.c.b16 %v1470, %v1468
  %v1641 = vpack.c.b16 %v1471, %v1469
  %v1642 = vpack.c.b16 %v1474, %v1472
  %v1643 = vpack.c.b16 %v1475, %v1473
  %v1644 = vpack.c.b16 %v1478, %v1476
  %v1645 = vpack.c.b16 %v1479, %v1477
  %v1646 = vpack.c.b16 %v1482, %v1480
  %v1647 = vpack.c.b16 %v1483, %v1481
  %v1648 = vpack.c.b16 %v1486, %v1484
  %v1649 = vpack.c.b16 %v1487, %v1485
  %v1650 = vpack.c.b16 %v1490, %v1488
  %v1651 = vpack.c.b16 %v1491, %v1489
  %v1652 = vpack.c.b16 %v1494, %v1492
  %v1653 = vpack.c.b16 %v1495, %v1493
  %v1654 = vpack.c.b16 %v1498, %v1496
  %v1655 = vpack.c.b16 %v1499, %v1497
  %v1656 = vpack.c.b16 %v1502, %v1500
  %v1657 = vpack.c.b16 %v1503, %v1501
  %v1658 = vpack.c.b16 %v1506, %v1504
  %v1659 = vpack.c.b16 %v1507, %v1505
  %v1660 = vpack.c.b16 %v1510, %v1508
  %v1661 = vpack.c.b16 %v1511, %v1509
  %v1662 = vpack.c.b16 %v1514, %v1512
  %v1663 = vpack.c.b16 %v1515, %v1513
  %v1664 = vpack.c.b16 %v1518, %v1516
  %v1665 = vpack.c.b16 %v1519, %v1517
  %v1666 = vpack.c.b16 %v1522, %v1520
  %v1667 = vpack.c.b16 %v1523, %v1521
  %v1668 = vpack.c.b16 %v1526, %v1524
  %v1669 = vpack.c.b16 %v1527, %v1525
  %v1670 = vpack.c.b16 %v1530, %v1528
  %v1671 = vpack.c.b16 %v1531, %v1529
  %v1672 = vpack.c.b16 %v1534, %v1532
  %v1673 = vpack.c.b16 %v1535, %v1533
  %v1674 = vpack.c.b16 %v1538, %v1536
  %v1675 = vpack.c.b16 %v1539, %v1537
  %v1676 = vpack.c.b16 %v1542, %v1540
  %v1677 = vpack.c.b16 %v1543, %v1541
  %v1678 = vpack.c.b16 %v1546, %v1544
  %v1679 = vpack.c.b16 %v1547, %v1545
  %v1680 = vpack.c.b16 %v1550, %v1548
  %v1681 = vpack.c.b16 %v1551, %v1549
  %v1682 = vpack.c.b16 %v1554, %v1552
  %v1683 = vpack.c.b16 %v1555, %v1553
  %1812 = vmatprep.subr.bf16.mxu0 %v1557
  %1813 = vmatpush1.bf16.msra.mxu0 %v1556
  %1814 = vmatprep.subr.bf16.mxu0 %v1559
  %1815 = vmatpush1.bf16.msra.mxu0 %v1558
  %1816 = vmatprep.subr.bf16.mxu0 %v1561
  %1817 = vmatpush1.bf16.msra.mxu0 %v1560
  %1818 = vmatprep.subr.bf16.mxu0 %v1563
  %1819 = vmatpush1.bf16.msra.mxu0 %v1562
  %1820 = vmatprep.subr.bf16.mxu0 %v1565
  %1821 = vmatpush1.bf16.msra.mxu0 %v1564
  %1822 = vmatprep.subr.bf16.mxu0 %v1567
  %1823 = vmatpush1.bf16.msra.mxu0 %v1566
  %1824 = vmatprep.subr.bf16.mxu0 %v1569
  %1825 = vmatpush1.bf16.msra.mxu0 %v1568
  %1826 = vmatprep.subr.bf16.mxu0 %v1571
  %1827 = vmatpush1.bf16.msra.mxu0 %v1570
  %1828 = vmatprep.subr.bf16.mxu0 %v1573
  %1829 = vmatpush1.bf16.msra.mxu0 %v1572
  %1830 = vmatprep.subr.bf16.mxu0 %v1575
  %1831 = vmatpush1.bf16.msra.mxu0 %v1574
  %1832 = vmatprep.subr.bf16.mxu0 %v1577
  %1833 = vmatpush1.bf16.msra.mxu0 %v1576
  %1834 = vmatprep.subr.bf16.mxu0 %v1579
  %1835 = vmatpush1.bf16.msra.mxu0 %v1578
  %1836 = vmatprep.subr.bf16.mxu0 %v1581
  %1837 = vmatpush1.bf16.msra.mxu0 %v1580
  %1838 = vmatprep.subr.bf16.mxu0 %v1583
  %1839 = vmatpush1.bf16.msra.mxu0 %v1582
  %1840 = vmatprep.subr.bf16.mxu0 %v1585
  %1841 = vmatpush1.bf16.msra.mxu0 %v1584
  %1842 = vmatprep.subr.bf16.mxu0 %v1587
  %1843 = vmatpush1.bf16.msra.mxu0 %v1586
  %1844 = vmatprep.mubr.bf16.mxu0 %v1025
  %1845 = vmatmul.mubr.bf16.gmra.mrb[0].mxu0 %v1024
  %v1846 = vpop.f32.mrb[0].mxu0
  %v1847 = vadd.f32 %v1165, %v1846
  %v1848 = vpop.f32.mrb[0].mxu0
  %v1849 = vadd.f32 %v1169, %v1848
  %v1850 = vpop.f32.mrb[0].mxu0
  %v1851 = vadd.f32 %v1165, %v1850
  %v1852 = vpop.f32.mrb[0].mxu0
  %v1853 = vadd.f32 %v1169, %v1852
  %1854 = vdwg.mxu0
  %1855 = vmatprep.subr.bf16.mxu0 %v1589
  %1856 = vmatpush1.bf16.msra.mxu0 %v1588
  %1857 = vmatprep.subr.bf16.mxu0 %v1591
  %1858 = vmatpush1.bf16.msra.mxu0 %v1590
  %1859 = vmatprep.subr.bf16.mxu0 %v1593
  %1860 = vmatpush1.bf16.msra.mxu0 %v1592
  %1861 = vmatprep.subr.bf16.mxu0 %v1595
  %1862 = vmatpush1.bf16.msra.mxu0 %v1594
  %1863 = vmatprep.subr.bf16.mxu0 %v1597
  %1864 = vmatpush1.bf16.msra.mxu0 %v1596
  %1865 = vmatprep.subr.bf16.mxu0 %v1599
  %1866 = vmatpush1.bf16.msra.mxu0 %v1598
  %1867 = vmatprep.subr.bf16.mxu0 %v1601
  %1868 = vmatpush1.bf16.msra.mxu0 %v1600
  %1869 = vmatprep.subr.bf16.mxu0 %v1603
  %1870 = vmatpush1.bf16.msra.mxu0 %v1602
  %1871 = vmatprep.subr.bf16.mxu0 %v1605
  %1872 = vmatpush1.bf16.msra.mxu0 %v1604
  %1873 = vmatprep.subr.bf16.mxu0 %v1607
  %1874 = vmatpush1.bf16.msra.mxu0 %v1606
  %1875 = vmatprep.subr.bf16.mxu0 %v1609
  %1876 = vmatpush1.bf16.msra.mxu0 %v1608
  %1877 = vmatprep.subr.bf16.mxu0 %v1611
  %1878 = vmatpush1.bf16.msra.mxu0 %v1610
  %1879 = vmatprep.subr.bf16.mxu0 %v1613
  %1880 = vmatpush1.bf16.msra.mxu0 %v1612
  %1881 = vmatprep.subr.bf16.mxu0 %v1615
  %1882 = vmatpush1.bf16.msra.mxu0 %v1614
  %1883 = vmatprep.subr.bf16.mxu0 %v1617
  %1884 = vmatpush1.bf16.msra.mxu0 %v1616
  %1885 = vmatprep.subr.bf16.mxu0 %v1619
  %1886 = vmatpush1.bf16.msra.mxu0 %v1618
  %1887 = vmatprep.mubr.bf16.mxu0 %v1027
  %1888 = vmatmul.mubr.bf16.gmra.mrb[0].mxu0 %v1026
  %v1889 = vpop.f32.mrb[0].mxu0
  %v1890 = vadd.f32 %v1847, %v1889
  %v1891 = vpop.f32.mrb[0].mxu0
  %v1892 = vadd.f32 %v1849, %v1891
  %v1893 = vpop.f32.mrb[0].mxu0
  %v1894 = vadd.f32 %v1851, %v1893
  %v1895 = vpop.f32.mrb[0].mxu0
  %v1896 = vadd.f32 %v1853, %v1895
  %1897 = vdwg.mxu0
  %1898 = vmatprep.subr.bf16.mxu0 %v1621
  %1899 = vmatpush1.bf16.msra.mxu0 %v1620
  %1900 = vmatprep.subr.bf16.mxu0 %v1623
  %1901 = vmatpush1.bf16.msra.mxu0 %v1622
  %1902 = vmatprep.subr.bf16.mxu0 %v1625
  %1903 = vmatpush1.bf16.msra.mxu0 %v1624
  %1904 = vmatprep.subr.bf16.mxu0 %v1627
  %1905 = vmatpush1.bf16.msra.mxu0 %v1626
  %1906 = vmatprep.subr.bf16.mxu0 %v1629
  %1907 = vmatpush1.bf16.msra.mxu0 %v1628
  %1908 = vmatprep.subr.bf16.mxu0 %v1631
  %1909 = vmatpush1.bf16.msra.mxu0 %v1630
  %1910 = vmatprep.subr.bf16.mxu0 %v1633
  %1911 = vmatpush1.bf16.msra.mxu0 %v1632
  %1912 = vmatprep.subr.bf16.mxu0 %v1635
  %1913 = vmatpush1.bf16.msra.mxu0 %v1634
  %1914 = vmatprep.subr.bf16.mxu0 %v1637
  %1915 = vmatpush1.bf16.msra.mxu0 %v1636
  %1916 = vmatprep.subr.bf16.mxu0 %v1639
  %1917 = vmatpush1.bf16.msra.mxu0 %v1638
  %1918 = vmatprep.subr.bf16.mxu0 %v1641
  %1919 = vmatpush1.bf16.msra.mxu0 %v1640
  %1920 = vmatprep.subr.bf16.mxu0 %v1643
  %1921 = vmatpush1.bf16.msra.mxu0 %v1642
  %1922 = vmatprep.subr.bf16.mxu0 %v1645
  %1923 = vmatpush1.bf16.msra.mxu0 %v1644
  %1924 = vmatprep.subr.bf16.mxu0 %v1647
  %1925 = vmatpush1.bf16.msra.mxu0 %v1646
  %1926 = vmatprep.subr.bf16.mxu0 %v1649
  %1927 = vmatpush1.bf16.msra.mxu0 %v1648
  %1928 = vmatprep.subr.bf16.mxu0 %v1651
  %1929 = vmatpush1.bf16.msra.mxu0 %v1650
  %1930 = vmatprep.mubr.bf16.mxu0 %v1029
  %1931 = vmatmul.mubr.bf16.gmra.mrb[0].mxu0 %v1028
  %v1932 = vpop.f32.mrb[0].mxu0
  %v1933 = vadd.f32 %v1890, %v1932
  %v1934 = vpop.f32.mrb[0].mxu0
  %v1935 = vadd.f32 %v1892, %v1934
  %v1936 = vpop.f32.mrb[0].mxu0
  %v1937 = vadd.f32 %v1894, %v1936
  %v1938 = vpop.f32.mrb[0].mxu0
  %v1939 = vadd.f32 %v1896, %v1938
  %1940 = vdwg.mxu0
  %1941 = vmatprep.subr.bf16.mxu0 %v1653
  %1942 = vmatpush1.bf16.msra.mxu0 %v1652
  %1943 = vmatprep.subr.bf16.mxu0 %v1655
  %1944 = vmatpush1.bf16.msra.mxu0 %v1654
  %1945 = vmatprep.subr.bf16.mxu0 %v1657
  %1946 = vmatpush1.bf16.msra.mxu0 %v1656
  %1947 = vmatprep.subr.bf16.mxu0 %v1659
  %1948 = vmatpush1.bf16.msra.mxu0 %v1658
  %1949 = vmatprep.subr.bf16.mxu0 %v1661
  %1950 = vmatpush1.bf16.msra.mxu0 %v1660
  %1951 = vmatprep.subr.bf16.mxu0 %v1663
  %1952 = vmatpush1.bf16.msra.mxu0 %v1662
  %1953 = vmatprep.subr.bf16.mxu0 %v1665
  %1954 = vmatpush1.bf16.msra.mxu0 %v1664
  %1955 = vmatprep.subr.bf16.mxu0 %v1667
  %1956 = vmatpush1.bf16.msra.mxu0 %v1666
  %1957 = vmatprep.subr.bf16.mxu0 %v1669
  %1958 = vmatpush1.bf16.msra.mxu0 %v1668
  %1959 = vmatprep.subr.bf16.mxu0 %v1671
  %1960 = vmatpush1.bf16.msra.mxu0 %v1670
  %1961 = vmatprep.subr.bf16.mxu0 %v1673
  %1962 = vmatpush1.bf16.msra.mxu0 %v1672
  %1963 = vmatprep.subr.bf16.mxu0 %v1675
  %1964 = vmatpush1.bf16.msra.mxu0 %v1674
  %1965 = vmatprep.subr.bf16.mxu0 %v1677
  %1966 = vmatpush1.bf16.msra.mxu0 %v1676
  %1967 = vmatprep.subr.bf16.mxu0 %v1679
  %1968 = vmatpush1.bf16.msra.mxu0 %v1678
  %1969 = vmatprep.subr.bf16.mxu0 %v1681
  %1970 = vmatpush1.bf16.msra.mxu0 %v1680
  %1971 = vmatprep.subr.bf16.mxu0 %v1683
  %1972 = vmatpush1.bf16.msra.mxu0 %v1682
  %1973 = vmatprep.mubr.bf16.mxu0 %v1031
  %1974 = vmatmul.mubr.bf16.gmra.mrb[0].mxu0 %v1030
  %v1975 = vpop.f32.mrb[0].mxu0
  %v1976 = vadd.f32 %v1933, %v1975
  %v1977 = vpop.f32.mrb[0].mxu0
  %v1978 = vadd.f32 %v1935, %v1977
  %v1979 = vpop.f32.mrb[0].mxu0
  %v1980 = vadd.f32 %v1937, %v1979
  %v1981 = vpop.f32.mrb[0].mxu0
  %v1982 = vadd.f32 %v1939, %v1981
  %1983 = vdwg.mxu0
  %v1984 = vadd.f32 %v20, %v1976
  %v1985 = vadd.f32 %v21, %v1978
  %v1986 = vadd.f32 %v22, %v1980
  %v1987 = vadd.f32 %v23, %v1982
  %1988 = vst [vmem:[%s5] sm:$0xff] %v1984
  %1989 = vst [vmem:[%s5 + $0x8] sm:$0xff] %v1985
  %1990 = vst [vmem:[%s5 + $0x10] sm:$0xff] %v1986
  %1991 = vst [vmem:[%s5 + $0x18] sm:$0xff] %v1987
  // Predicated region
  $region22: #{feed_forward.1} parent=0 // pred_check
    _
  $region23: #{feed_forward.1} parent=0 // pred_check_branch
    %1993 = sbr.rel (0) target = $region25
  $region24: #{feed_forward.1} parent=0 // pred_region
    _
  $region25: #{feed_forward.1} parent=0 // pred_fallthru
    _
  // Predicated region
  $region26: #{feed_forward.1} parent=0 // pred_check
    _
  $region27: #{feed_forward.1} parent=0 // pred_check_branch
    %1995 = sbr.rel (0) target = $region29
  $region28: #{feed_forward.1} parent=0 // pred_region
    _
  $region29: #{feed_forward.1} parent=0 // pred_fallthru
    _

</llo_original>
